<compile_context>
chip_gen: v6e
topology: v6e:2x2x1
jax: 0.10.0
libtpu: 0.0.40
codegen_flags: <defaults>
</compile_context>

<pallas_src>
import functools
import math

import jax
import jax.numpy as jnp
from jax import lax
from jax.experimental import pallas as pl
from jax.experimental.pallas import tpu as pltpu


def _supcon_tile_kernel(frow_ref, fcol_ref, labc_ref, labr_ref,   # inputs
                        mlp_ref, cnt_ref,                          # outputs
                        m_sc, z_sc, s_sc, d_sc,                    # scratch
                        *, n_valid, block_m, block_n):
    i = pl.program_id(0)          # row tile (parallel)
    j = pl.program_id(1)          # column tile (arbitrary / reduction)
    nj = pl.num_programs(1)

    @pl.when(j == 0)
    def _init():
        m_sc[...] = jnp.full((block_m, 1), -1e30, jnp.float32)
        z_sc[...] = jnp.zeros((block_m, 1), jnp.float32)
        s_sc[...] = jnp.zeros((block_m, 1), jnp.float32)
        d_sc[...] = jnp.zeros((block_m, 1), jnp.float32)

    # sim[a, b] = <f_a, f_b> / temperature  (temperature folded into a single
    # 1/sqrt(T) pre-scale of the features; bf16 MXU operands, f32 accumulation).
    sim = lax.dot_general(
        frow_ref[...], fcol_ref[...], (((1,), (1,)), ((), ())),
        preferred_element_type=jnp.float32)                     # (TM, TN) f32

    # Global row / column indices of this tile (cheap (TM,1)/(1,TN) iotas).
    row_g = i * block_m + lax.broadcasted_iota(jnp.int32, (block_m, 1), 0)
    col_g = j * block_n + lax.broadcasted_iota(jnp.int32, (1, block_n), 1)
    col_pad = col_g >= n_valid                # (1, TN) padded columns
    is_diag = row_g == col_g                  # self-comparisons (diag tiles only hit)
    excl = jnp.logical_or(is_diag, col_pad)   # excluded from softmax & positives

    sim_m = jnp.where(excl, jnp.float32(-1e30), sim)

    # Online softmax denominator (running max + rescaled running sum).
    m_prev = m_sc[...]
    m_new = jnp.maximum(m_prev, jnp.max(sim_m, axis=1, keepdims=True))
    alpha = jnp.exp(m_prev - m_new)
    p = jnp.exp(sim_m - m_new)                # excluded entries underflow to 0
    z_sc[...] = alpha * z_sc[...] + jnp.sum(p, axis=1, keepdims=True)
    m_sc[...] = m_new

    # Positive-pair mask: label equality with self / padded columns removed.
    pos = jnp.logical_and(labc_ref[...] == labr_ref[...], jnp.logical_not(excl))
    d_sc[...] += jnp.sum(pos.astype(jnp.float32), axis=1, keepdims=True)
    s_sc[...] += jnp.sum(jnp.where(pos, sim, 0.0), axis=1, keepdims=True)

    # Finalize after the last column tile of this row tile.
    @pl.when(j == nj - 1)
    def _finalize():
        row_valid = row_g < n_valid                          # (TM, 1) padded rows out
        denom = d_sc[...]
        has_pos = jnp.logical_and(denom > 0.0, row_valid)
        log_z = m_sc[...] + jnp.log(z_sc[...])               # log sum exp over mask
        numer = s_sc[...] - denom * log_z                    # = sum(mask * log_prob)
        inv_d = pl.reciprocal(jnp.where(has_pos, denom, 1.0), approx=False)
        mlp_ref[...] = jnp.where(has_pos, numer * inv_d, 0.0)
        cnt_ref[...] = has_pos.astype(jnp.float32)


def supcon_loss(features, labels, *, temperature=0.07, contrast_mode='all',
                base_temperature=0.07, block_size=128):
    """Pallas TPU implementation of SupConLoss.forward (n_views == 1 path).

    features: [bsz, n_views, dim] float32
    labels:   [bsz] int32
    returns:  scalar float32 loss

    block_size: sim-tile edge. 128 is safe everywhere; use 256 on v6e/v7x for
    large N to fill the 2x256^2 MXU.
    """
    assert contrast_mode == 'all'
    bsz, n_views, dim = features.shape
    # The reference scatter on a [bsz, bsz] mask is only shape-consistent for
    # n_views == 1; we reproduce exactly that path.
    assert n_views == 1, "reference SupConLoss code is only valid for n_views == 1"
    n = bsz * n_views

    # contrast_feature = cat(unbind(features, dim=1), dim=0)  (reshape for n_views==1).
    feat = jnp.reshape(jnp.transpose(features, (1, 0, 2)), (n, dim)).astype(jnp.float32)

    # Fold 1/temperature into a single pre-scale: <f/sqrt(T), f/sqrt(T)> = <f,f>/T.
    feat = feat * jnp.float32(1.0 / math.sqrt(float(temperature)))

    tm = tn = int(block_size)
    n_pad = int(pl.cdiv(n, tm)) * tm
    d_pad = int(pl.cdiv(dim, 128)) * 128

    # Zero-pad (zeros don't change dot products) and cast to bf16 for the MXU.
    feat_p = jnp.zeros((n_pad, d_pad), jnp.float32).at[:n, :dim].set(feat)
    feat_p = feat_p.astype(jnp.bfloat16)

    lab = labels.astype(jnp.int32).reshape(n)
    lab_p = jnp.full((n_pad,), -1, jnp.int32).at[:n].set(lab)
    lab_col = lab_p.reshape(n_pad, 1)
    lab_row = lab_p.reshape(1, n_pad)

    grid = (n_pad // tm, n_pad // tn)

    kernel = functools.partial(_supcon_tile_kernel,
                               n_valid=n, block_m=tm, block_n=tn)

    mlp_rows, cnt_rows = pl.pallas_call(
        kernel,
        out_shape=(jax.ShapeDtypeStruct((n_pad, 1), jnp.float32),   # mean_log_prob_pos per row
                   jax.ShapeDtypeStruct((n_pad, 1), jnp.float32)),  # has-positive per row
        grid_spec=pltpu.PrefetchScalarGridSpec(
            num_scalar_prefetch=0,
            grid=grid,
            in_specs=[
                pl.BlockSpec((tm, d_pad), lambda i, j: (i, 0)),   # anchor (row) tile of F
                pl.BlockSpec((tn, d_pad), lambda i, j: (j, 0)),   # contrast (col) tile of F
                pl.BlockSpec((tm, 1), lambda i, j: (i, 0)),       # labels column tile
                pl.BlockSpec((1, tn), lambda i, j: (0, j)),       # labels row tile
            ],
            out_specs=[
                pl.BlockSpec((tm, 1), lambda i, j: (i, 0)),
                pl.BlockSpec((tm, 1), lambda i, j: (i, 0)),
            ],
            scratch_shapes=[pltpu.VMEM((tm, 1), jnp.float32)] * 4,  # m, Z, sum(mask*sim), denom
        ),
        compiler_params=pltpu.CompilerParams(
            dimension_semantics=("parallel", "arbitrary")),
    )(feat_p, feat_p, lab_col, lab_row)

    total = jnp.sum(mlp_rows)          # padded / no-positive rows contribute 0
    nz = jnp.sum(cnt_rows)             # == nonzero_num in the reference
    loss = -(float(temperature) / float(base_temperature)) * total / jnp.maximum(nz, 1.0)
    # Reference degenerates (0/0 -> NaN) when no row has any positive pair; guard to 0.
    return jnp.where(nz > 0, loss, 0.0)


def _supcon_loss_ref(features, labels, temperature=0.07, base_temperature=0.07):
    """Pure-JAX f32 reference mirroring the PyTorch forward (n_views == 1)."""
    bsz, n_views, dim = features.shape
    n = bsz * n_views
    f = jnp.reshape(jnp.transpose(features, (1, 0, 2)), (n, dim)).astype(jnp.float32)
    sim = (f @ f.T) / temperature
    logits = sim - jnp.max(sim, axis=1, keepdims=True)
    logits_mask = 1.0 - jnp.eye(n, dtype=jnp.float32)
    mask = (labels[:, None] == labels[None, :]).astype(jnp.float32) * logits_mask
    exp_logits = jnp.exp(logits) * logits_mask
    log_prob = logits - jnp.log(jnp.sum(exp_logits, axis=1, keepdims=True))
    numer = jnp.sum(mask * log_prob, axis=1)
    denom = jnp.sum(mask, axis=1)
    has_pos = denom != 0.0
    mlp = jnp.where(has_pos, numer / jnp.where(has_pos, denom, 1.0), 0.0)
    nz = jnp.sum(has_pos.astype(jnp.float32))
    return -(temperature / base_temperature) * jnp.sum(mlp) / nz


if __name__ == "__main__":
    key = jax.random.PRNGKey(0)

    def run_case(bsz, dim, n_classes, k):
        kf, kl = jax.random.split(k)
        feats = jax.random.normal(kf, (bsz, 1, dim), dtype=jnp.float32)
        feats = feats / jnp.linalg.norm(feats, axis=-1, keepdims=True)
        labels = jax.random.randint(kl, (bsz,), 0, n_classes, dtype=jnp.int32)

        out = jax.block_until_ready(supcon_loss(feats, labels))
        ref = jax.block_until_ready(_supcon_loss_ref(feats, labels))

        assert jnp.isfinite(out), ("loss not finite", bsz, dim, out)
        # bf16 MXU inputs -> loosened tolerance vs the f32 reference.
        assert jnp.allclose(out, ref, rtol=5e-2, atol=5e-2), (bsz, dim, out, ref)
        return out

    k1, k2 = jax.random.split(key)
    run_case(8, 32, 3, k1)      # small case: single 128x128 tile (N padded to 128)
    run_case(300, 96, 4, k2)    # multi-tile case with padding: N_pad=384, grid (3, 3)

    print("KERNEL_OK")
</pallas_src>

<mosaic_0001>
module attributes {stable_mosaic.version = 11 : i64} {
  func.func @_supcon_tile_kernel(%arg0: i32, %arg1: i32, %arg2: memref<128x128xbf16, #tpu.memory_space<vmem>>, %arg3: memref<128x128xbf16, #tpu.memory_space<vmem>>, %arg4: memref<128x1xi32, #tpu.memory_space<vmem>>, %arg5: memref<1x128xi32, #tpu.memory_space<vmem>>, %arg6: memref<128x1xf32, #tpu.memory_space<vmem>>, %arg7: memref<128x1xf32, #tpu.memory_space<vmem>>, %arg8: memref<128x1xf32, #tpu.memory_space<vmem>>, %arg9: memref<128x1xf32, #tpu.memory_space<vmem>>, %arg10: memref<128x1xf32, #tpu.memory_space<vmem>>, %arg11: memref<128x1xf32, #tpu.memory_space<vmem>>) attributes {dimension_semantics = [#tpu.dimension_semantics<parallel>, #tpu.dimension_semantics<arbitrary>], iteration_bounds = array<i64: 1, 1>, scalar_prefetch = 0 : i64, scratch_operands = 4 : i64, tpu.core_type = #tpu.core_type<tc>, window_params = [{transform_indices = @transform_0, window_bounds = array<i64: 128, 128>}, {transform_indices = @transform_1, window_bounds = array<i64: 128, 128>}, {transform_indices = @transform_2, window_bounds = array<i64: 128, 1>}, {transform_indices = @transform_3, window_bounds = array<i64: 1, 128>}, {transform_indices = @transform_4, window_bounds = array<i64: 128, 1>}, {transform_indices = @transform_5, window_bounds = array<i64: 128, 1>}]} {
    %c0_i32 = arith.constant 0 : i32
    %0 = arith.cmpi eq, %arg1, %c0_i32 : i32
    %1 = arith.extui %0 : i1 to i32
    %c0_i32_0 = arith.constant 0 : i32
    %2 = arith.cmpi ne, %1, %c0_i32_0 : i32
    scf.if %2 {
      %cst_34 = arith.constant -1.000000e+30 : f32
      %63 = vector.broadcast %cst_34 : f32 to vector<128x1xf32>
      %c0_35 = arith.constant 0 : index
      %c0_36 = arith.constant 0 : index
      %64 = vector.load %arg8[%c0_35, %c0_36] : memref<128x1xf32, #tpu.memory_space<vmem>>, vector<128x1xf32>
      tpu.vector_store %arg8[%c0_35, %c0_36], %63 {strides = array<i32>} : memref<128x1xf32, #tpu.memory_space<vmem>>, vector<128x1xf32>,
      %cst_37 = arith.constant 0.000000e+00 : f32
      %65 = vector.broadcast %cst_37 : f32 to vector<128x1xf32>
      %c0_38 = arith.constant 0 : index
      %c0_39 = arith.constant 0 : index
      %66 = vector.load %arg9[%c0_38, %c0_39] : memref<128x1xf32, #tpu.memory_space<vmem>>, vector<128x1xf32>
      tpu.vector_store %arg9[%c0_38, %c0_39], %65 {strides = array<i32>} : memref<128x1xf32, #tpu.memory_space<vmem>>, vector<128x1xf32>,
      %cst_40 = arith.constant 0.000000e+00 : f32
      %67 = vector.broadcast %cst_40 : f32 to vector<128x1xf32>
      %c0_41 = arith.constant 0 : index
      %c0_42 = arith.constant 0 : index
      %68 = vector.load %arg10[%c0_41, %c0_42] : memref<128x1xf32, #tpu.memory_space<vmem>>, vector<128x1xf32>
      tpu.vector_store %arg10[%c0_41, %c0_42], %67 {strides = array<i32>} : memref<128x1xf32, #tpu.memory_space<vmem>>, vector<128x1xf32>,
      %cst_43 = arith.constant 0.000000e+00 : f32
      %69 = vector.broadcast %cst_43 : f32 to vector<128x1xf32>
      %c0_44 = arith.constant 0 : index
      %c0_45 = arith.constant 0 : index
      %70 = vector.load %arg11[%c0_44, %c0_45] : memref<128x1xf32, #tpu.memory_space<vmem>>, vector<128x1xf32>
      tpu.vector_store %arg11[%c0_44, %c0_45], %69 {strides = array<i32>} : memref<128x1xf32, #tpu.memory_space<vmem>>, vector<128x1xf32>,
    } else {
    }
    %c0 = arith.constant 0 : index
    %c0_1 = arith.constant 0 : index
    %3 = vector.load %arg2[%c0, %c0_1] : memref<128x128xbf16, #tpu.memory_space<vmem>>, vector<128x128xbf16>
    %c0_2 = arith.constant 0 : index
    %c0_3 = arith.constant 0 : index
    %4 = vector.load %arg3[%c0_2, %c0_3] : memref<128x128xbf16, #tpu.memory_space<vmem>>, vector<128x128xbf16>
    %cst = arith.constant dense<0.000000e+00> : vector<128x128xf32>
    %5 = tpu.matmul %3, %4, %cst {dimension_numbers = #tpu.dot_dimension_numbers<[1], [1], [0], [0], [0, 0, 1, 0], [], []>} : vector<128x128xbf16>, vector<128x128xbf16>, vector<128x128xf32> -> vector<128x128xf32>
    %c128_i32 = arith.constant 128 : i32
    %6 = arith.muli %arg0, %c128_i32 : i32
    %7 = tpu.iota {dimensions = array<i32: 0>} : vector<128x1xi32>
    %8 = vector.broadcast %6 : i32 to vector<128x1xi32>
    %9 = arith.addi %8, %7 : vector<128x1xi32>
    %c128_i32_4 = arith.constant 128 : i32
    %10 = arith.muli %arg1, %c128_i32_4 : i32
    %11 = tpu.iota {dimensions = array<i32: 1>} : vector<1x128xi32>
    %12 = vector.broadcast %10 : i32 to vector<1x128xi32>
    %13 = arith.addi %12, %11 : vector<1x128xi32>
    %c8_i32 = arith.constant 8 : i32
    %14 = vector.broadcast %c8_i32 : i32 to vector<1x128xi32>
    %15 = arith.cmpi sge, %13, %14 : vector<1x128xi32>
    %16 = vector.broadcast %9 : vector<128x1xi32> to vector<128x128xi32>
    %17 = vector.broadcast %13 : vector<1x128xi32> to vector<128x128xi32>
    %18 = arith.cmpi eq, %16, %17 : vector<128x128xi32>
    %19 = vector.broadcast %15 : vector<1x128xi1> to vector<128x128xi1>
    %20 = arith.ori %18, %19 : vector<128x128xi1>
    %cst_5 = arith.constant -1.000000e+30 : f32
    %21 = vector.broadcast %cst_5 : f32 to vector<128x128xf32>
    %22 = arith.select %20, %21, %5 : vector<128x128xi1>, vector<128x128xf32>
    %c0_6 = arith.constant 0 : index
    %c0_7 = arith.constant 0 : index
    %23 = vector.load %arg8[%c0_6, %c0_7] : memref<128x1xf32, #tpu.memory_space<vmem>>, vector<128x1xf32>
    %cst_8 = arith.constant dense<0xFF800000> : vector<128xf32>
    %24 = vector.multi_reduction <maximumf>, %22, %cst_8 [1] : vector<128x128xf32> to vector<128xf32>
    %25 = vector.shape_cast %24 : vector<128xf32> to vector<128x1xf32>
    %26 = arith.maximumf %23, %25 : vector<128x1xf32>
    %27 = arith.subf %23, %26 : vector<128x1xf32>
    %28 = math.exp %27 : vector<128x1xf32>
    %29 = vector.broadcast %26 : vector<128x1xf32> to vector<128x128xf32>
    %30 = arith.subf %22, %29 : vector<128x128xf32>
    %31 = math.exp %30 : vector<128x128xf32>
    %c0_9 = arith.constant 0 : index
    %c0_10 = arith.constant 0 : index
    %32 = vector.load %arg9[%c0_9, %c0_10] : memref<128x1xf32, #tpu.memory_space<vmem>>, vector<128x1xf32>
    %33 = arith.mulf %28, %32 : vector<128x1xf32>
    %cst_11 = arith.constant dense<0.000000e+00> : vector<128xf32>
    %34 = vector.multi_reduction <add>, %31, %cst_11 [1] : vector<128x128xf32> to vector<128xf32>
    %35 = vector.shape_cast %34 : vector<128xf32> to vector<128x1xf32>
    %36 = arith.addf %33, %35 : vector<128x1xf32>
    %c0_12 = arith.constant 0 : index
    %c0_13 = arith.constant 0 : index
    %37 = vector.load %arg9[%c0_12, %c0_13] : memref<128x1xf32, #tpu.memory_space<vmem>>, vector<128x1xf32>
    tpu.vector_store %arg9[%c0_12, %c0_13], %36 {strides = array<i32>} : memref<128x1xf32, #tpu.memory_space<vmem>>, vector<128x1xf32>,
    %c0_14 = arith.constant 0 : index
    %c0_15 = arith.constant 0 : index
    %38 = vector.load %arg8[%c0_14, %c0_15] : memref<128x1xf32, #tpu.memory_space<vmem>>, vector<128x1xf32>
    tpu.vector_store %arg8[%c0_14, %c0_15], %26 {strides = array<i32>} : memref<128x1xf32, #tpu.memory_space<vmem>>, vector<128x1xf32>,
    %c0_16 = arith.constant 0 : index
    %c0_17 = arith.constant 0 : index
    %39 = vector.load %arg4[%c0_16, %c0_17] : memref<128x1xi32, #tpu.memory_space<vmem>>, vector<128x1xi32>
    %c0_18 = arith.constant 0 : index
    %c0_19 = arith.constant 0 : index
    %40 = vector.load %arg5[%c0_18, %c0_19] : memref<1x128xi32, #tpu.memory_space<vmem>>, vector<1x128xi32>
    %41 = vector.broadcast %39 : vector<128x1xi32> to vector<128x128xi32>
    %42 = vector.broadcast %40 : vector<1x128xi32> to vector<128x128xi32>
    %43 = arith.cmpi eq, %41, %42 : vector<128x128xi32>
    %cst_20 = arith.constant dense<true> : vector<128x128xi1>
    %44 = arith.xori %20, %cst_20 : vector<128x128xi1>
    %45 = arith.andi %43, %44 : vector<128x128xi1>
    %c0_21 = arith.constant 0 : index
    %c0_22 = arith.constant 0 : index
    %46 = vector.load %arg11[%c0_21, %c0_22] : memref<128x1xf32, #tpu.memory_space<vmem>>, vector<128x1xf32>
    %47 = arith.extui %45 : vector<128x128xi1> to vector<128x128xi32>
    %48 = arith.sitofp %47 : vector<128x128xi32> to vector<128x128xf32>
    %cst_23 = arith.constant dense<0.000000e+00> : vector<128xf32>
    %49 = vector.multi_reduction <add>, %48, %cst_23 [1] : vector<128x128xf32> to vector<128xf32>
    %50 = vector.shape_cast %49 : vector<128xf32> to vector<128x1xf32>
    %51 = arith.addf %46, %50 : vector<128x1xf32>
    %c0_24 = arith.constant 0 : index
    %c0_25 = arith.constant 0 : index
    %52 = vector.load %arg11[%c0_24, %c0_25] : memref<128x1xf32, #tpu.memory_space<vmem>>, vector<128x1xf32>
    tpu.vector_store %arg11[%c0_24, %c0_25], %51 {strides = array<i32>} : memref<128x1xf32, #tpu.memory_space<vmem>>, vector<128x1xf32>,
    %c0_26 = arith.constant 0 : index
    %c0_27 = arith.constant 0 : index
    %53 = vector.load %arg10[%c0_26, %c0_27] : memref<128x1xf32, #tpu.memory_space<vmem>>, vector<128x1xf32>
    %cst_28 = arith.constant 0.000000e+00 : f32
    %54 = vector.broadcast %cst_28 : f32 to vector<128x128xf32>
    %55 = arith.select %45, %5, %54 : vector<128x128xi1>, vector<128x128xf32>
    %cst_29 = arith.constant dense<0.000000e+00> : vector<128xf32>
    %56 = vector.multi_reduction <add>, %55, %cst_29 [1] : vector<128x128xf32> to vector<128xf32>
    %57 = vector.shape_cast %56 : vector<128xf32> to vector<128x1xf32>
    %58 = arith.addf %53, %57 : vector<128x1xf32>
    %c0_30 = arith.constant 0 : index
    %c0_31 = arith.constant 0 : index
    %59 = vector.load %arg10[%c0_30, %c0_31] : memref<128x1xf32, #tpu.memory_space<vmem>>, vector<128x1xf32>
    tpu.vector_store %arg10[%c0_30, %c0_31], %58 {strides = array<i32>} : memref<128x1xf32, #tpu.memory_space<vmem>>, vector<128x1xf32>,
    %c0_i32_32 = arith.constant 0 : i32
    %60 = arith.cmpi eq, %arg1, %c0_i32_32 : i32
    %61 = arith.extui %60 : i1 to i32
    %c0_i32_33 = arith.constant 0 : i32
    %62 = arith.cmpi ne, %61, %c0_i32_33 : i32
    scf.if %62 {
      %c8_i32_34 = arith.constant 8 : i32
      %63 = vector.broadcast %c8_i32_34 : i32 to vector<128x1xi32>
      %64 = arith.cmpi slt, %9, %63 : vector<128x1xi32>
      %c0_35 = arith.constant 0 : index
      %c0_36 = arith.constant 0 : index
      %65 = vector.load %arg11[%c0_35, %c0_36] : memref<128x1xf32, #tpu.memory_space<vmem>>, vector<128x1xf32>
      %cst_37 = arith.constant 0.000000e+00 : f32
      %66 = vector.broadcast %cst_37 : f32 to vector<128x1xf32>
      %67 = arith.cmpf ogt, %65, %66 : vector<128x1xf32>
      %68 = arith.andi %67, %64 : vector<128x1xi1>
      %c0_38 = arith.constant 0 : index
      %c0_39 = arith.constant 0 : index
      %69 = vector.load %arg8[%c0_38, %c0_39] : memref<128x1xf32, #tpu.memory_space<vmem>>, vector<128x1xf32>
      %c0_40 = arith.constant 0 : index
      %c0_41 = arith.constant 0 : index
      %70 = vector.load %arg9[%c0_40, %c0_41] : memref<128x1xf32, #tpu.memory_space<vmem>>, vector<128x1xf32>
      %71 = math.log %70 : vector<128x1xf32>
      %72 = arith.addf %69, %71 : vector<128x1xf32>
      %c0_42 = arith.constant 0 : index
      %c0_43 = arith.constant 0 : index
      %73 = vector.load %arg10[%c0_42, %c0_43] : memref<128x1xf32, #tpu.memory_space<vmem>>, vector<128x1xf32>
      %74 = arith.mulf %65, %72 : vector<128x1xf32>
      %75 = arith.subf %73, %74 : vector<128x1xf32>
      %cst_44 = arith.constant 1.000000e+00 : f32
      %76 = vector.broadcast %cst_44 : f32 to vector<128x1xf32>
      %77 = arith.select %68, %65, %76 : vector<128x1xi1>, vector<128x1xf32>
      %78 = tpu.reciprocal %77 : vector<128x1xf32> -> vector<128x1xf32>
      %79 = arith.mulf %75, %78 : vector<128x1xf32>
      %cst_45 = arith.constant 0.000000e+00 : f32
      %80 = vector.broadcast %cst_45 : f32 to vector<128x1xf32>
      %81 = arith.select %68, %79, %80 : vector<128x1xi1>, vector<128x1xf32>
      %c0_46 = arith.constant 0 : index
      %c0_47 = arith.constant 0 : index
      %82 = vector.load %arg6[%c0_46, %c0_47] : memref<128x1xf32, #tpu.memory_space<vmem>>, vector<128x1xf32>
      tpu.vector_store %arg6[%c0_46, %c0_47], %81 {strides = array<i32>} : memref<128x1xf32, #tpu.memory_space<vmem>>, vector<128x1xf32>,
      %83 = arith.extui %68 : vector<128x1xi1> to vector<128x1xi32>
      %84 = arith.sitofp %83 : vector<128x1xi32> to vector<128x1xf32>
      %c0_48 = arith.constant 0 : index
      %c0_49 = arith.constant 0 : index
      %85 = vector.load %arg7[%c0_48, %c0_49] : memref<128x1xf32, #tpu.memory_space<vmem>>, vector<128x1xf32>
      tpu.vector_store %arg7[%c0_48, %c0_49], %84 {strides = array<i32>} : memref<128x1xf32, #tpu.memory_space<vmem>>, vector<128x1xf32>,
    } else {
    }
    return
  }
  func.func @transform_0(%arg0: i32, %arg1: i32) -> (i32, i32) {
    %c0_i32 = arith.constant 0 : i32
    %c0_i32_0 = arith.constant 0 : i32
    return %arg0, %c0_i32 : i32, i32
  }
  func.func @transform_1(%arg0: i32, %arg1: i32) -> (i32, i32) {
    %c0_i32 = arith.constant 0 : i32
    %c0_i32_0 = arith.constant 0 : i32
    return %arg1, %c0_i32 : i32, i32
  }
  func.func @transform_2(%arg0: i32, %arg1: i32) -> (i32, i32) {
    %c0_i32 = arith.constant 0 : i32
    %c0_i32_0 = arith.constant 0 : i32
    return %arg0, %c0_i32 : i32, i32
  }
  func.func @transform_3(%arg0: i32, %arg1: i32) -> (i32, i32) {
    %c0_i32 = arith.constant 0 : i32
    %c0_i32_0 = arith.constant 0 : i32
    return %c0_i32, %arg1 : i32, i32
  }
  func.func @transform_4(%arg0: i32, %arg1: i32) -> (i32, i32) {
    %c0_i32 = arith.constant 0 : i32
    %c0_i32_0 = arith.constant 0 : i32
    return %arg0, %c0_i32 : i32, i32
  }
  func.func @transform_5(%arg0: i32, %arg1: i32) -> (i32, i32) {
    %c0_i32 = arith.constant 0 : i32
    %c0_i32_0 = arith.constant 0 : i32
    return %arg0, %c0_i32 : i32, i32
  }
}

</mosaic_0001>

<llo_original>
// kernel: tpu_custom_call.1
$region0: #{tpu_custom_call.1}
  #allocation0 [shape = 'u32[]', space=smem, size = 0x4, offset = 0x4, fixed_abs, tag = 'smem constant byte address 0x4 - core index']
  #allocation1 [shape = 'u32[144,128]{1,0:T(1,128)}', space=vmem, size = 0x12000, scoped, tag = 'internal scratch']
  #allocation2 [shape = 'f32[128,1]{1,0:T(8,128)}', space=vmem, size = 0x10000, scoped, tag = 'scratch operand']
  #allocation3 [shape = 'f32[128,1]{1,0:T(8,128)}', space=vmem, size = 0x10000, scoped, tag = 'scratch operand']
  #allocation4 [shape = 'f32[128,1]{1,0:T(8,128)}', space=vmem, size = 0x10000, scoped, tag = 'scratch operand']
  #allocation5 [shape = 'f32[128,1]{1,0:T(8,128)}', space=vmem, size = 0x10000, scoped, tag = 'scratch operand']
  %s0 = inlined_call_operand.vmem [shape: bf16[128,128], index: 0, kind: input, shape index: {}]
  %s1 = inlined_call_operand.vmem [shape: bf16[128,128], index: 1, kind: input, shape index: {}]
  %s2 = inlined_call_operand.vmem [shape: s32[128,1], index: 2, kind: input, shape index: {}]
  %s3 = inlined_call_operand.vmem [shape: s32[1,128], index: 3, kind: input, shape index: {}]
  %s4 = inlined_call_operand.vmem [shape: f32[128,1], index: 4, kind: output, shape index: {0}]
  %s5 = inlined_call_operand.vmem [shape: f32[128,1], index: 5, kind: output, shape index: {1}]
  %6 = xla_tuple %s4, %s5
  %s7 = sld [smem:[#allocation0]]
  $region42: #{tpu_custom_call.1} parent=0
    _
  %s9 = ssub.s32 1, %s7
  %s10 = scalar_select 0, %s9, %s7
  // Predicated region
  $region2: #{tpu_custom_call.1} parent=0 // pred_check
    _
  $region3: #{tpu_custom_call.1} parent=0 // pred_check_branch
    %12 = sbr.rel (0) target = $region5
  $region4: #{tpu_custom_call.1} parent=0 // pred_region
    _
  $region5: #{tpu_custom_call.1} parent=0 // pred_fallthru
    _
  // Predicated region
  $region6: #{tpu_custom_call.1} parent=0 // pred_check
    _
  $region7: #{tpu_custom_call.1} parent=0 // pred_check_branch
    %14 = sbr.rel (0) target = $region9
  $region8: #{tpu_custom_call.1} parent=0 // pred_region
    _
  $region9: #{tpu_custom_call.1} parent=0 // pred_fallthru
    _
  // Predicated region
  $region10: #{tpu_custom_call.1} parent=0 // pred_check
    _
  $region11: #{tpu_custom_call.1} parent=0 // pred_check_branch
    %16 = sbr.rel (0) target = $region13
  $region12: #{tpu_custom_call.1} parent=0 // pred_region
    _
  $region13: #{tpu_custom_call.1} parent=0 // pred_fallthru
    _
  // Predicated region
  $region14: #{tpu_custom_call.1} parent=0 // pred_check
    _
  $region15: #{tpu_custom_call.1} parent=0 // pred_check_branch
    %18 = sbr.rel (0) target = $region17
  $region16: #{tpu_custom_call.1} parent=0 // pred_region
    _
  $region17: #{tpu_custom_call.1} parent=0 // pred_fallthru
    _
  %p20 = scmp.eq.s32.totalorder 0, 0
  // Predicated region
  $region18: #{tpu_custom_call.1} parent=0 // pred_check
    %p21 = pneg %p20
  $region19: #{tpu_custom_call.1} parent=0 // pred_check_branch
    %23 = sbr.rel (%p21) target = $region21
  $region20: #{tpu_custom_call.1} parent=0 // pred_region
    %vm24 = vcmask 7168
    %25 = vst.msk [vmem:[#allocation2] sm:$0xff] %vm24, -1e+30
    %26 = vst.msk [vmem:[#allocation2 + $0x8] sm:$0xff] %vm24, -1e+30
    %27 = vst.msk [vmem:[#allocation2 + $0x10] sm:$0xff] %vm24, -1e+30
    %28 = vst.msk [vmem:[#allocation2 + $0x18] sm:$0xff] %vm24, -1e+30
    %29 = vst.msk [vmem:[#allocation2 + $0x20] sm:$0xff] %vm24, -1e+30
    %30 = vst.msk [vmem:[#allocation2 + $0x28] sm:$0xff] %vm24, -1e+30
    %31 = vst.msk [vmem:[#allocation2 + $0x30] sm:$0xff] %vm24, -1e+30
    %32 = vst.msk [vmem:[#allocation2 + $0x38] sm:$0xff] %vm24, -1e+30
    %33 = vst.msk [vmem:[#allocation2 + $0x40] sm:$0xff] %vm24, -1e+30
    %34 = vst.msk [vmem:[#allocation2 + $0x48] sm:$0xff] %vm24, -1e+30
    %35 = vst.msk [vmem:[#allocation2 + $0x50] sm:$0xff] %vm24, -1e+30
    %36 = vst.msk [vmem:[#allocation2 + $0x58] sm:$0xff] %vm24, -1e+30
    %37 = vst.msk [vmem:[#allocation2 + $0x60] sm:$0xff] %vm24, -1e+30
    %38 = vst.msk [vmem:[#allocation2 + $0x68] sm:$0xff] %vm24, -1e+30
    %39 = vst.msk [vmem:[#allocation2 + $0x70] sm:$0xff] %vm24, -1e+30
    %40 = vst.msk [vmem:[#allocation2 + $0x78] sm:$0xff] %vm24, -1e+30
    %41 = vst.msk [vmem:[#allocation3] sm:$0xff] %vm24, 0.0
    %42 = vst.msk [vmem:[#allocation3 + $0x8] sm:$0xff] %vm24, 0.0
    %43 = vst.msk [vmem:[#allocation3 + $0x10] sm:$0xff] %vm24, 0.0
    %44 = vst.msk [vmem:[#allocation3 + $0x18] sm:$0xff] %vm24, 0.0
    %45 = vst.msk [vmem:[#allocation3 + $0x20] sm:$0xff] %vm24, 0.0
    %46 = vst.msk [vmem:[#allocation3 + $0x28] sm:$0xff] %vm24, 0.0
    %47 = vst.msk [vmem:[#allocation3 + $0x30] sm:$0xff] %vm24, 0.0
    %48 = vst.msk [vmem:[#allocation3 + $0x38] sm:$0xff] %vm24, 0.0
    %49 = vst.msk [vmem:[#allocation3 + $0x40] sm:$0xff] %vm24, 0.0
    %50 = vst.msk [vmem:[#allocation3 + $0x48] sm:$0xff] %vm24, 0.0
    %51 = vst.msk [vmem:[#allocation3 + $0x50] sm:$0xff] %vm24, 0.0
    %52 = vst.msk [vmem:[#allocation3 + $0x58] sm:$0xff] %vm24, 0.0
    %53 = vst.msk [vmem:[#allocation3 + $0x60] sm:$0xff] %vm24, 0.0
    %54 = vst.msk [vmem:[#allocation3 + $0x68] sm:$0xff] %vm24, 0.0
    %55 = vst.msk [vmem:[#allocation3 + $0x70] sm:$0xff] %vm24, 0.0
    %56 = vst.msk [vmem:[#allocation3 + $0x78] sm:$0xff] %vm24, 0.0
    %57 = vst.msk [vmem:[#allocation4] sm:$0xff] %vm24, 0.0
    %58 = vst.msk [vmem:[#allocation4 + $0x8] sm:$0xff] %vm24, 0.0
    %59 = vst.msk [vmem:[#allocation4 + $0x10] sm:$0xff] %vm24, 0.0
    %60 = vst.msk [vmem:[#allocation4 + $0x18] sm:$0xff] %vm24, 0.0
    %61 = vst.msk [vmem:[#allocation4 + $0x20] sm:$0xff] %vm24, 0.0
    %62 = vst.msk [vmem:[#allocation4 + $0x28] sm:$0xff] %vm24, 0.0
    %63 = vst.msk [vmem:[#allocation4 + $0x30] sm:$0xff] %vm24, 0.0
    %64 = vst.msk [vmem:[#allocation4 + $0x38] sm:$0xff] %vm24, 0.0
    %65 = vst.msk [vmem:[#allocation4 + $0x40] sm:$0xff] %vm24, 0.0
    %66 = vst.msk [vmem:[#allocation4 + $0x48] sm:$0xff] %vm24, 0.0
    %67 = vst.msk [vmem:[#allocation4 + $0x50] sm:$0xff] %vm24, 0.0
    %68 = vst.msk [vmem:[#allocation4 + $0x58] sm:$0xff] %vm24, 0.0
    %69 = vst.msk [vmem:[#allocation4 + $0x60] sm:$0xff] %vm24, 0.0
    %70 = vst.msk [vmem:[#allocation4 + $0x68] sm:$0xff] %vm24, 0.0
    %71 = vst.msk [vmem:[#allocation4 + $0x70] sm:$0xff] %vm24, 0.0
    %72 = vst.msk [vmem:[#allocation4 + $0x78] sm:$0xff] %vm24, 0.0
    %73 = vst.msk [vmem:[#allocation5] sm:$0xff] %vm24, 0.0
    %74 = vst.msk [vmem:[#allocation5 + $0x8] sm:$0xff] %vm24, 0.0
    %75 = vst.msk [vmem:[#allocation5 + $0x10] sm:$0xff] %vm24, 0.0
    %76 = vst.msk [vmem:[#allocation5 + $0x18] sm:$0xff] %vm24, 0.0
    %77 = vst.msk [vmem:[#allocation5 + $0x20] sm:$0xff] %vm24, 0.0
    %78 = vst.msk [vmem:[#allocation5 + $0x28] sm:$0xff] %vm24, 0.0
    %79 = vst.msk [vmem:[#allocation5 + $0x30] sm:$0xff] %vm24, 0.0
    %80 = vst.msk [vmem:[#allocation5 + $0x38] sm:$0xff] %vm24, 0.0
    %81 = vst.msk [vmem:[#allocation5 + $0x40] sm:$0xff] %vm24, 0.0
    %82 = vst.msk [vmem:[#allocation5 + $0x48] sm:$0xff] %vm24, 0.0
    %83 = vst.msk [vmem:[#allocation5 + $0x50] sm:$0xff] %vm24, 0.0
    %84 = vst.msk [vmem:[#allocation5 + $0x58] sm:$0xff] %vm24, 0.0
    %85 = vst.msk [vmem:[#allocation5 + $0x60] sm:$0xff] %vm24, 0.0
    %86 = vst.msk [vmem:[#allocation5 + $0x68] sm:$0xff] %vm24, 0.0
    %87 = vst.msk [vmem:[#allocation5 + $0x70] sm:$0xff] %vm24, 0.0
    %88 = vst.msk [vmem:[#allocation5 + $0x78] sm:$0xff] %vm24, 0.0
  $region21: #{tpu_custom_call.1} parent=0 // pred_fallthru
    _
  %v89 = vld [vmem:[%s0] sm:$0xf]
  %v90 = vld [vmem:[%s0 + $0x4] sm:$0xf]
  %v91 = vld [vmem:[%s0 + $0x8] sm:$0xf]
  %v92 = vld [vmem:[%s0 + $0xc] sm:$0xf]
  %v93 = vld [vmem:[%s0 + $0x10] sm:$0xf]
  %v94 = vld [vmem:[%s0 + $0x14] sm:$0xf]
  %v95 = vld [vmem:[%s0 + $0x18] sm:$0xf]
  %v96 = vld [vmem:[%s0 + $0x1c] sm:$0xf]
  %v97 = vld [vmem:[%s0 + $0x20] sm:$0xf]
  %v98 = vld [vmem:[%s0 + $0x24] sm:$0xf]
  %v99 = vld [vmem:[%s0 + $0x28] sm:$0xf]
  %v100 = vld [vmem:[%s0 + $0x2c] sm:$0xf]
  %v101 = vld [vmem:[%s0 + $0x30] sm:$0xf]
  %v102 = vld [vmem:[%s0 + $0x34] sm:$0xf]
  %v103 = vld [vmem:[%s0 + $0x38] sm:$0xf]
  %v104 = vld [vmem:[%s0 + $0x3c] sm:$0xf]
  %v105 = vld [vmem:[%s1] sm:$0xf]
  %v106 = vld [vmem:[%s1 + $0x4] sm:$0xf]
  %v107 = vld [vmem:[%s1 + $0x8] sm:$0xf]
  %v108 = vld [vmem:[%s1 + $0xc] sm:$0xf]
  %v109 = vld [vmem:[%s1 + $0x10] sm:$0xf]
  %v110 = vld [vmem:[%s1 + $0x14] sm:$0xf]
  %v111 = vld [vmem:[%s1 + $0x18] sm:$0xf]
  %v112 = vld [vmem:[%s1 + $0x1c] sm:$0xf]
  %v113 = vld [vmem:[%s1 + $0x20] sm:$0xf]
  %v114 = vld [vmem:[%s1 + $0x24] sm:$0xf]
  %v115 = vld [vmem:[%s1 + $0x28] sm:$0xf]
  %v116 = vld [vmem:[%s1 + $0x2c] sm:$0xf]
  %v117 = vld [vmem:[%s1 + $0x30] sm:$0xf]
  %v118 = vld [vmem:[%s1 + $0x34] sm:$0xf]
  %v119 = vld [vmem:[%s1 + $0x38] sm:$0xf]
  %v120 = vld [vmem:[%s1 + $0x3c] sm:$0xf]
  %v137 = vunpack.c.l.b16 %v89
  %v138 = vunpack.c.l.b16 %v90
  %v139 = vunpack.c.l.b16 %v91
  %v140 = vunpack.c.l.b16 %v92
  %v141 = vunpack.c.l.b16 %v93
  %v142 = vunpack.c.l.b16 %v94
  %v143 = vunpack.c.l.b16 %v95
  %v144 = vunpack.c.l.b16 %v96
  %v145 = vunpack.c.l.b16 %v97
  %v146 = vunpack.c.l.b16 %v98
  %v147 = vunpack.c.l.b16 %v99
  %v148 = vunpack.c.l.b16 %v100
  %v149 = vunpack.c.l.b16 %v101
  %v150 = vunpack.c.l.b16 %v102
  %v151 = vunpack.c.l.b16 %v103
  %v152 = vunpack.c.l.b16 %v104
  %v153 = vpack.c.b16 %v138, %v137
  %v154 = vpack.c.b16 %v140, %v139
  %v155 = vpack.c.b16 %v142, %v141
  %v156 = vpack.c.b16 %v144, %v143
  %v157 = vpack.c.b16 %v146, %v145
  %v158 = vpack.c.b16 %v148, %v147
  %v159 = vpack.c.b16 %v150, %v149
  %v160 = vpack.c.b16 %v152, %v151
  %v185 = vunpack.c.l.b16 %v105
  %v186 = vunpack.c.l.b16 %v106
  %v187 = vunpack.c.l.b16 %v107
  %v188 = vunpack.c.l.b16 %v108
  %v189 = vunpack.c.l.b16 %v109
  %v190 = vunpack.c.l.b16 %v110
  %v191 = vunpack.c.l.b16 %v111
  %v192 = vunpack.c.l.b16 %v112
  %v193 = vunpack.c.l.b16 %v113
  %v194 = vunpack.c.l.b16 %v114
  %v195 = vunpack.c.l.b16 %v115
  %v196 = vunpack.c.l.b16 %v116
  %v197 = vunpack.c.l.b16 %v117
  %v198 = vunpack.c.l.b16 %v118
  %v199 = vunpack.c.l.b16 %v119
  %v200 = vunpack.c.l.b16 %v120
  %v201 = vpack.c.b16 %v186, %v185
  %v202 = vpack.c.b16 %v188, %v187
  %v203 = vpack.c.b16 %v190, %v189
  %v204 = vpack.c.b16 %v192, %v191
  %v205 = vpack.c.b16 %v194, %v193
  %v206 = vpack.c.b16 %v196, %v195
  %v207 = vpack.c.b16 %v198, %v197
  %v208 = vpack.c.b16 %v200, %v199
  %217 = vmatprep.subr.bf16.mxu0 0
  %218 = vmatpush1.bf16.xpose.msra.mxu0 %v208
  %219 = vmatprep.subr.bf16.mxu0 0
  %220 = vmatpush1.bf16.xpose.msra.mxu0 %v207
  %221 = vmatprep.subr.bf16.mxu0 0
  %222 = vmatpush1.bf16.xpose.msra.mxu0 %v206
  %223 = vmatprep.subr.bf16.mxu0 0
  %224 = vmatpush1.bf16.xpose.msra.mxu0 %v205
  %225 = vmatprep.subr.bf16.mxu0 0
  %226 = vmatpush1.bf16.xpose.msra.mxu0 %v204
  %227 = vmatprep.subr.bf16.mxu0 0
  %228 = vmatpush1.bf16.xpose.msra.mxu0 %v203
  %229 = vmatprep.subr.bf16.mxu0 0
  %230 = vmatpush1.bf16.xpose.msra.mxu0 %v202
  %231 = vmatprep.subr.bf16.mxu0 0
  %232 = vmatpush1.bf16.xpose.msra.mxu0 %v201
  %233 = vmatprep.subr.bf16.mxu0 0
  %234 = vmatpush2.bf16.xpose.msra.mxu0 0
  %235 = vmatprep.subr.bf16.mxu0 0
  %236 = vmatpush2.bf16.xpose.msra.mxu0 0
  %237 = vmatprep.subr.bf16.mxu0 0
  %238 = vmatpush2.bf16.xpose.msra.mxu0 0
  %239 = vmatprep.subr.bf16.mxu0 0
  %240 = vmatpush2.bf16.xpose.msra.mxu0 0
  %241 = vmatprep.subr.bf16.mxu0 0
  %242 = vmatpush2.bf16.xpose.msra.mxu0 0
  %243 = vmatprep.subr.bf16.mxu0 0
  %244 = vmatpush2.bf16.xpose.msra.mxu0 0
  %245 = vmatprep.subr.bf16.mxu0 0
  %246 = vmatpush2.bf16.xpose.msra.mxu0 0
  %247 = vmatprep.subr.bf16.mxu0 0
  %248 = vmatpush2.bf16.xpose.msra.mxu0 0
  %249 = vmatprep.mubr.bf16.mxu0 0
  %250 = vmatmul.mubr.bf16.gmra.mxu0 %v153
  %v251 = vpop.f32.mrf.mxu0
  %v252 = vadd.f32 0.0, %v251
  %v253 = vpop.f32.mrf.mxu0
  %v254 = vpop.f32.mrf.mxu0
  %v255 = vadd.f32 0.0, %v254
  %v256 = vpop.f32.mrf.mxu0
  %257 = vmatprep.mubr.bf16.mxu0 0
  %258 = vmatmul.mubr.bf16.gmra.mxu0 %v154
  %v259 = vpop.f32.mrf.mxu0
  %v260 = vadd.f32 0.0, %v259
  %v261 = vpop.f32.mrf.mxu0
  %v262 = vpop.f32.mrf.mxu0
  %v263 = vadd.f32 0.0, %v262
  %v264 = vpop.f32.mrf.mxu0
  %265 = vmatprep.mubr.bf16.mxu0 0
  %266 = vmatmul.mubr.bf16.gmra.mxu0 %v155
  %v267 = vpop.f32.mrf.mxu0
  %v268 = vadd.f32 0.0, %v267
  %v269 = vpop.f32.mrf.mxu0
  %v270 = vpop.f32.mrf.mxu0
  %v271 = vadd.f32 0.0, %v270
  %v272 = vpop.f32.mrf.mxu0
  %273 = vmatprep.mubr.bf16.mxu0 0
  %274 = vmatmul.mubr.bf16.gmra.mxu0 %v156
  %v275 = vpop.f32.mrf.mxu0
  %v276 = vadd.f32 0.0, %v275
  %v277 = vpop.f32.mrf.mxu0
  %v278 = vpop.f32.mrf.mxu0
  %v279 = vadd.f32 0.0, %v278
  %v280 = vpop.f32.mrf.mxu0
  %281 = vmatprep.mubr.bf16.mxu0 0
  %282 = vmatmul.mubr.bf16.gmra.mxu0 %v157
  %v283 = vpop.f32.mrf.mxu0
  %v284 = vadd.f32 0.0, %v283
  %v285 = vpop.f32.mrf.mxu0
  %v286 = vpop.f32.mrf.mxu0
  %v287 = vadd.f32 0.0, %v286
  %v288 = vpop.f32.mrf.mxu0
  %289 = vmatprep.mubr.bf16.mxu0 0
  %290 = vmatmul.mubr.bf16.gmra.mxu0 %v158
  %v291 = vpop.f32.mrf.mxu0
  %v292 = vadd.f32 0.0, %v291
  %v293 = vpop.f32.mrf.mxu0
  %v294 = vpop.f32.mrf.mxu0
  %v295 = vadd.f32 0.0, %v294
  %v296 = vpop.f32.mrf.mxu0
  %297 = vmatprep.mubr.bf16.mxu0 0
  %298 = vmatmul.mubr.bf16.gmra.mxu0 %v159
  %v299 = vpop.f32.mrf.mxu0
  %v300 = vadd.f32 0.0, %v299
  %v301 = vpop.f32.mrf.mxu0
  %v302 = vpop.f32.mrf.mxu0
  %v303 = vadd.f32 0.0, %v302
  %v304 = vpop.f32.mrf.mxu0
  %305 = vmatprep.mubr.bf16.mxu0 0
  %306 = vmatmul.mubr.bf16.gmra.mxu0 %v160
  %v307 = vpop.f32.mrf.mxu0
  %v308 = vadd.f32 0.0, %v307
  %v309 = vpop.f32.mrf.mxu0
  %v310 = vpop.f32.mrf.mxu0
  %v311 = vadd.f32 0.0, %v310
  %v312 = vpop.f32.mrf.mxu0
  %313 = vdwg.mxu0
  %s314 = smul.u32 0, 128
  %v315 = vlaneseq
  %v316 = vshrl.u32 %v315, 7
  %v317 = vadd.s32 %v316, 8
  %v318 = vadd.s32 %v316, 16
  %v319 = vadd.s32 %v316, 24
  %v320 = vadd.s32 %v316, 32
  %v321 = vadd.s32 %v316, 40
  %v322 = vadd.s32 %v316, 48
  %v323 = vadd.s32 %v316, 56
  %v324 = vadd.s32 %v316, 64
  %v325 = vadd.s32 %v316, 72
  %v326 = vadd.s32 %v316, 80
  %v327 = vadd.s32 %v316, 88
  %v328 = vadd.s32 %v316, 96
  %v329 = vadd.s32 %v316, 104
  %v330 = vadd.s32 %v316, 112
  %v331 = vadd.s32 %v316, 120
  %v332 = vstv %s314
  %v333 = vadd.s32 %v332, %v316
  %v334 = vadd.s32 %v332, %v317
  %v335 = vadd.s32 %v332, %v318
  %v336 = vadd.s32 %v332, %v319
  %v337 = vadd.s32 %v332, %v320
  %v338 = vadd.s32 %v332, %v321
  %v339 = vadd.s32 %v332, %v322
  %v340 = vadd.s32 %v332, %v323
  %v341 = vadd.s32 %v332, %v324
  %v342 = vadd.s32 %v332, %v325
  %v343 = vadd.s32 %v332, %v326
  %v344 = vadd.s32 %v332, %v327
  %v345 = vadd.s32 %v332, %v328
  %v346 = vadd.s32 %v332, %v329
  %v347 = vadd.s32 %v332, %v330
  %v348 = vadd.s32 %v332, %v331
  %s349 = smul.u32 0, 128
  %v350 = vlaneseq
  %v351 = vand.u32 %v350, 127
  %v352 = vstv %s349
  %v353 = vadd.s32 %v352, %v351
  %vm354 = vcmp.ge.s32.totalorder %v353, 8
  %vm355 = vcmp.eq.s32.totalorder %v333, %v353
  %vm356 = vcmp.eq.s32.totalorder %v334, %v353
  %vm357 = vcmp.eq.s32.totalorder %v335, %v353
  %vm358 = vcmp.eq.s32.totalorder %v336, %v353
  %vm359 = vcmp.eq.s32.totalorder %v337, %v353
  %vm360 = vcmp.eq.s32.totalorder %v338, %v353
  %vm361 = vcmp.eq.s32.totalorder %v339, %v353
  %vm362 = vcmp.eq.s32.totalorder %v340, %v353
  %vm363 = vcmp.eq.s32.totalorder %v341, %v353
  %vm364 = vcmp.eq.s32.totalorder %v342, %v353
  %vm365 = vcmp.eq.s32.totalorder %v343, %v353
  %vm366 = vcmp.eq.s32.totalorder %v344, %v353
  %vm367 = vcmp.eq.s32.totalorder %v345, %v353
  %vm368 = vcmp.eq.s32.totalorder %v346, %v353
  %vm369 = vcmp.eq.s32.totalorder %v347, %v353
  %vm370 = vcmp.eq.s32.totalorder %v348, %v353
  %v371 = vsel %vm354, 1, 0
  %vm372 = vcmp.eq.s32.totalorder %v371, 1
  %vm373 = vmor %vm355, %vm372
  %vm374 = vmor %vm356, %vm372
  %vm375 = vmor %vm357, %vm372
  %vm376 = vmor %vm358, %vm372
  %vm377 = vmor %vm359, %vm372
  %vm378 = vmor %vm360, %vm372
  %vm379 = vmor %vm361, %vm372
  %vm380 = vmor %vm362, %vm372
  %vm381 = vmor %vm363, %vm372
  %vm382 = vmor %vm364, %vm372
  %vm383 = vmor %vm365, %vm372
  %vm384 = vmor %vm366, %vm372
  %vm385 = vmor %vm367, %vm372
  %vm386 = vmor %vm368, %vm372
  %vm387 = vmor %vm369, %vm372
  %vm388 = vmor %vm370, %vm372
  %v389 = vsel %vm373, -1e+30, %v252
  %v390 = vsel %vm374, -1e+30, %v255
  %v391 = vsel %vm375, -1e+30, %v260
  %v392 = vsel %vm376, -1e+30, %v263
  %v393 = vsel %vm377, -1e+30, %v268
  %v394 = vsel %vm378, -1e+30, %v271
  %v395 = vsel %vm379, -1e+30, %v276
  %v396 = vsel %vm380, -1e+30, %v279
  %v397 = vsel %vm381, -1e+30, %v284
  %v398 = vsel %vm382, -1e+30, %v287
  %v399 = vsel %vm383, -1e+30, %v292
  %v400 = vsel %vm384, -1e+30, %v295
  %v401 = vsel %vm385, -1e+30, %v300
  %v402 = vsel %vm386, -1e+30, %v303
  %v403 = vsel %vm387, -1e+30, %v308
  %v404 = vsel %vm388, -1e+30, %v311
  %v405 = vld [vmem:[#allocation2] sm:$0xff]
  %v406 = vld [vmem:[#allocation2 + $0x8] sm:$0xff]
  %v407 = vld [vmem:[#allocation2 + $0x10] sm:$0xff]
  %v408 = vld [vmem:[#allocation2 + $0x18] sm:$0xff]
  %v409 = vld [vmem:[#allocation2 + $0x20] sm:$0xff]
  %v410 = vld [vmem:[#allocation2 + $0x28] sm:$0xff]
  %v411 = vld [vmem:[#allocation2 + $0x30] sm:$0xff]
  %v412 = vld [vmem:[#allocation2 + $0x38] sm:$0xff]
  %v413 = vld [vmem:[#allocation2 + $0x40] sm:$0xff]
  %v414 = vld [vmem:[#allocation2 + $0x48] sm:$0xff]
  %v415 = vld [vmem:[#allocation2 + $0x50] sm:$0xff]
  %v416 = vld [vmem:[#allocation2 + $0x58] sm:$0xff]
  %v417 = vld [vmem:[#allocation2 + $0x60] sm:$0xff]
  %v418 = vld [vmem:[#allocation2 + $0x68] sm:$0xff]
  %v419 = vld [vmem:[#allocation2 + $0x70] sm:$0xff]
  %v420 = vld [vmem:[#allocation2 + $0x78] sm:$0xff]
  %421 = vmax.xlane.f32.xlu0 %v389
  %v422 = vpop.xlane.xlu0 %421
  %423 = vmax.xlane.f32.xlu0 %v390
  %v424 = vpop.xlane.xlu0 %423
  %425 = vmax.xlane.f32.xlu0 %v391
  %v426 = vpop.xlane.xlu0 %425
  %427 = vmax.xlane.f32.xlu0 %v392
  %v428 = vpop.xlane.xlu0 %427
  %429 = vmax.xlane.f32.xlu0 %v393
  %v430 = vpop.xlane.xlu0 %429
  %431 = vmax.xlane.f32.xlu0 %v394
  %v432 = vpop.xlane.xlu0 %431
  %433 = vmax.xlane.f32.xlu0 %v395
  %v434 = vpop.xlane.xlu0 %433
  %435 = vmax.xlane.f32.xlu0 %v396
  %v436 = vpop.xlane.xlu0 %435
  %437 = vmax.xlane.f32.xlu0 %v397
  %v438 = vpop.xlane.xlu0 %437
  %439 = vmax.xlane.f32.xlu0 %v398
  %v440 = vpop.xlane.xlu0 %439
  %441 = vmax.xlane.f32.xlu0 %v399
  %v442 = vpop.xlane.xlu0 %441
  %443 = vmax.xlane.f32.xlu0 %v400
  %v444 = vpop.xlane.xlu0 %443
  %445 = vmax.xlane.f32.xlu0 %v401
  %v446 = vpop.xlane.xlu0 %445
  %447 = vmax.xlane.f32.xlu0 %v402
  %v448 = vpop.xlane.xlu0 %447
  %449 = vmax.xlane.f32.xlu0 %v403
  %v450 = vpop.xlane.xlu0 %449
  %451 = vmax.xlane.f32.xlu0 %v404
  %v452 = vpop.xlane.xlu0 %451
  %v453 = vmax.f32 %v405, %v422
  %v454 = vmax.f32 %v406, %v424
  %v455 = vmax.f32 %v407, %v426
  %v456 = vmax.f32 %v408, %v428
  %v457 = vmax.f32 %v409, %v430
  %v458 = vmax.f32 %v410, %v432
  %v459 = vmax.f32 %v411, %v434
  %v460 = vmax.f32 %v412, %v436
  %v461 = vmax.f32 %v413, %v438
  %v462 = vmax.f32 %v414, %v440
  %v463 = vmax.f32 %v415, %v442
  %v464 = vmax.f32 %v416, %v444
  %v465 = vmax.f32 %v417, %v446
  %v466 = vmax.f32 %v418, %v448
  %v467 = vmax.f32 %v419, %v450
  %v468 = vmax.f32 %v420, %v452
  %v469 = vsub.f32 %v405, %v453
  %v470 = vsub.f32 %v406, %v454
  %v471 = vsub.f32 %v407, %v455
  %v472 = vsub.f32 %v408, %v456
  %v473 = vsub.f32 %v409, %v457
  %v474 = vsub.f32 %v410, %v458
  %v475 = vsub.f32 %v411, %v459
  %v476 = vsub.f32 %v412, %v460
  %v477 = vsub.f32 %v413, %v461
  %v478 = vsub.f32 %v414, %v462
  %v479 = vsub.f32 %v415, %v463
  %v480 = vsub.f32 %v416, %v464
  %v481 = vsub.f32 %v417, %v465
  %v482 = vsub.f32 %v418, %v466
  %v483 = vsub.f32 %v419, %v467
  %v484 = vsub.f32 %v420, %v468
  %v485 = vmul.f32 %v469, 1.442695
  %v486 = vpow.pop %v485
  %v487 = vmul.f32 %v470, 1.442695
  %v488 = vpow.pop %v487
  %v489 = vmul.f32 %v471, 1.442695
  %v490 = vpow.pop %v489
  %v491 = vmul.f32 %v472, 1.442695
  %v492 = vpow.pop %v491
  %v493 = vmul.f32 %v473, 1.442695
  %v494 = vpow.pop %v493
  %v495 = vmul.f32 %v474, 1.442695
  %v496 = vpow.pop %v495
  %v497 = vmul.f32 %v475, 1.442695
  %v498 = vpow.pop %v497
  %v499 = vmul.f32 %v476, 1.442695
  %v500 = vpow.pop %v499
  %v501 = vmul.f32 %v477, 1.442695
  %v502 = vpow.pop %v501
  %v503 = vmul.f32 %v478, 1.442695
  %v504 = vpow.pop %v503
  %v505 = vmul.f32 %v479, 1.442695
  %v506 = vpow.pop %v505
  %v507 = vmul.f32 %v480, 1.442695
  %v508 = vpow.pop %v507
  %v509 = vmul.f32 %v481, 1.442695
  %v510 = vpow.pop %v509
  %v511 = vmul.f32 %v482, 1.442695
  %v512 = vpow.pop %v511
  %v513 = vmul.f32 %v483, 1.442695
  %v514 = vpow.pop %v513
  %v515 = vmul.f32 %v484, 1.442695
  %v516 = vpow.pop %v515
  %518 = vset.pattern.permute.xlu0 0
  %519 = vperm.xlu0 %518, %v453
  %v520 = vpop.permute.xlu0 %519
  %523 = vset.pattern.permute.xlu0 0
  %524 = vperm.xlu0 %523, %v454
  %v525 = vpop.permute.xlu0 %524
  %528 = vset.pattern.permute.xlu0 0
  %529 = vperm.xlu0 %528, %v455
  %v530 = vpop.permute.xlu0 %529
  %533 = vset.pattern.permute.xlu0 0
  %534 = vperm.xlu0 %533, %v456
  %v535 = vpop.permute.xlu0 %534
  %538 = vset.pattern.permute.xlu0 0
  %539 = vperm.xlu0 %538, %v457
  %v540 = vpop.permute.xlu0 %539
  %543 = vset.pattern.permute.xlu0 0
  %544 = vperm.xlu0 %543, %v458
  %v545 = vpop.permute.xlu0 %544
  %548 = vset.pattern.permute.xlu0 0
  %549 = vperm.xlu0 %548, %v459
  %v550 = vpop.permute.xlu0 %549
  %553 = vset.pattern.permute.xlu0 0
  %554 = vperm.xlu0 %553, %v460
  %v555 = vpop.permute.xlu0 %554
  %558 = vset.pattern.permute.xlu0 0
  %559 = vperm.xlu0 %558, %v461
  %v560 = vpop.permute.xlu0 %559
  %563 = vset.pattern.permute.xlu0 0
  %564 = vperm.xlu0 %563, %v462
  %v565 = vpop.permute.xlu0 %564
  %568 = vset.pattern.permute.xlu0 0
  %569 = vperm.xlu0 %568, %v463
  %v570 = vpop.permute.xlu0 %569
  %573 = vset.pattern.permute.xlu0 0
  %574 = vperm.xlu0 %573, %v464
  %v575 = vpop.permute.xlu0 %574
  %578 = vset.pattern.permute.xlu0 0
  %579 = vperm.xlu0 %578, %v465
  %v580 = vpop.permute.xlu0 %579
  %583 = vset.pattern.permute.xlu0 0
  %584 = vperm.xlu0 %583, %v466
  %v585 = vpop.permute.xlu0 %584
  %588 = vset.pattern.permute.xlu0 0
  %589 = vperm.xlu0 %588, %v467
  %v590 = vpop.permute.xlu0 %589
  %593 = vset.pattern.permute.xlu0 0
  %594 = vperm.xlu0 %593, %v468
  %v595 = vpop.permute.xlu0 %594
  %v597 = vsub.f32 %v389, %v520
  %v598 = vsub.f32 %v390, %v525
  %v599 = vsub.f32 %v391, %v530
  %v600 = vsub.f32 %v392, %v535
  %v601 = vsub.f32 %v393, %v540
  %v602 = vsub.f32 %v394, %v545
  %v603 = vsub.f32 %v395, %v550
  %v604 = vsub.f32 %v396, %v555
  %v605 = vsub.f32 %v397, %v560
  %v606 = vsub.f32 %v398, %v565
  %v607 = vsub.f32 %v399, %v570
  %v608 = vsub.f32 %v400, %v575
  %v609 = vsub.f32 %v401, %v580
  %v610 = vsub.f32 %v402, %v585
  %v611 = vsub.f32 %v403, %v590
  %v612 = vsub.f32 %v404, %v595
  %v613 = vmul.f32 %v597, 1.442695
  %v614 = vpow.pop %v613
  %v615 = vmul.f32 %v598, 1.442695
  %v616 = vpow.pop %v615
  %v617 = vmul.f32 %v599, 1.442695
  %v618 = vpow.pop %v617
  %v619 = vmul.f32 %v600, 1.442695
  %v620 = vpow.pop %v619
  %v621 = vmul.f32 %v601, 1.442695
  %v622 = vpow.pop %v621
  %v623 = vmul.f32 %v602, 1.442695
  %v624 = vpow.pop %v623
  %v625 = vmul.f32 %v603, 1.442695
  %v626 = vpow.pop %v625
  %v627 = vmul.f32 %v604, 1.442695
  %v628 = vpow.pop %v627
  %v629 = vmul.f32 %v605, 1.442695
  %v630 = vpow.pop %v629
  %v631 = vmul.f32 %v606, 1.442695
  %v632 = vpow.pop %v631
  %v633 = vmul.f32 %v607, 1.442695
  %v634 = vpow.pop %v633
  %v635 = vmul.f32 %v608, 1.442695
  %v636 = vpow.pop %v635
  %v637 = vmul.f32 %v609, 1.442695
  %v638 = vpow.pop %v637
  %v639 = vmul.f32 %v610, 1.442695
  %v640 = vpow.pop %v639
  %v641 = vmul.f32 %v611, 1.442695
  %v642 = vpow.pop %v641
  %v643 = vmul.f32 %v612, 1.442695
  %v644 = vpow.pop %v643
  %v645 = vld [vmem:[#allocation3] sm:$0xff]
  %v646 = vld [vmem:[#allocation3 + $0x8] sm:$0xff]
  %v647 = vld [vmem:[#allocation3 + $0x10] sm:$0xff]
  %v648 = vld [vmem:[#allocation3 + $0x18] sm:$0xff]
  %v649 = vld [vmem:[#allocation3 + $0x20] sm:$0xff]
  %v650 = vld [vmem:[#allocation3 + $0x28] sm:$0xff]
  %v651 = vld [vmem:[#allocation3 + $0x30] sm:$0xff]
  %v652 = vld [vmem:[#allocation3 + $0x38] sm:$0xff]
  %v653 = vld [vmem:[#allocation3 + $0x40] sm:$0xff]
  %v654 = vld [vmem:[#allocation3 + $0x48] sm:$0xff]
  %v655 = vld [vmem:[#allocation3 + $0x50] sm:$0xff]
  %v656 = vld [vmem:[#allocation3 + $0x58] sm:$0xff]
  %v657 = vld [vmem:[#allocation3 + $0x60] sm:$0xff]
  %v658 = vld [vmem:[#allocation3 + $0x68] sm:$0xff]
  %v659 = vld [vmem:[#allocation3 + $0x70] sm:$0xff]
  %v660 = vld [vmem:[#allocation3 + $0x78] sm:$0xff]
  %v661 = vmul.f32 %v486, %v645
  %v662 = vmul.f32 %v488, %v646
  %v663 = vmul.f32 %v490, %v647
  %v664 = vmul.f32 %v492, %v648
  %v665 = vmul.f32 %v494, %v649
  %v666 = vmul.f32 %v496, %v650
  %v667 = vmul.f32 %v498, %v651
  %v668 = vmul.f32 %v500, %v652
  %v669 = vmul.f32 %v502, %v653
  %v670 = vmul.f32 %v504, %v654
  %v671 = vmul.f32 %v506, %v655
  %v672 = vmul.f32 %v508, %v656
  %v673 = vmul.f32 %v510, %v657
  %v674 = vmul.f32 %v512, %v658
  %v675 = vmul.f32 %v514, %v659
  %v676 = vmul.f32 %v516, %v660
  %677 = vadd.xlane.f32.xlu0 %v614
  %v678 = vpop.xlane.xlu0 %677
  %679 = vadd.xlane.f32.xlu0 %v616
  %v680 = vpop.xlane.xlu0 %679
  %681 = vadd.xlane.f32.xlu0 %v618
  %v682 = vpop.xlane.xlu0 %681
  %683 = vadd.xlane.f32.xlu0 %v620
  %v684 = vpop.xlane.xlu0 %683
  %685 = vadd.xlane.f32.xlu0 %v622
  %v686 = vpop.xlane.xlu0 %685
  %687 = vadd.xlane.f32.xlu0 %v624
  %v688 = vpop.xlane.xlu0 %687
  %689 = vadd.xlane.f32.xlu0 %v626
  %v690 = vpop.xlane.xlu0 %689
  %691 = vadd.xlane.f32.xlu0 %v628
  %v692 = vpop.xlane.xlu0 %691
  %693 = vadd.xlane.f32.xlu0 %v630
  %v694 = vpop.xlane.xlu0 %693
  %695 = vadd.xlane.f32.xlu0 %v632
  %v696 = vpop.xlane.xlu0 %695
  %697 = vadd.xlane.f32.xlu0 %v634
  %v698 = vpop.xlane.xlu0 %697
  %699 = vadd.xlane.f32.xlu0 %v636
  %v700 = vpop.xlane.xlu0 %699
  %701 = vadd.xlane.f32.xlu0 %v638
  %v702 = vpop.xlane.xlu0 %701
  %703 = vadd.xlane.f32.xlu0 %v640
  %v704 = vpop.xlane.xlu0 %703
  %705 = vadd.xlane.f32.xlu0 %v642
  %v706 = vpop.xlane.xlu0 %705
  %707 = vadd.xlane.f32.xlu0 %v644
  %v708 = vpop.xlane.xlu0 %707
  %v709 = vadd.f32 %v661, %v678
  %v710 = vadd.f32 %v662, %v680
  %v711 = vadd.f32 %v663, %v682
  %v712 = vadd.f32 %v664, %v684
  %v713 = vadd.f32 %v665, %v686
  %v714 = vadd.f32 %v666, %v688
  %v715 = vadd.f32 %v667, %v690
  %v716 = vadd.f32 %v668, %v692
  %v717 = vadd.f32 %v669, %v694
  %v718 = vadd.f32 %v670, %v696
  %v719 = vadd.f32 %v671, %v698
  %v720 = vadd.f32 %v672, %v700
  %v721 = vadd.f32 %v673, %v702
  %v722 = vadd.f32 %v674, %v704
  %v723 = vadd.f32 %v675, %v706
  %v724 = vadd.f32 %v676, %v708
  %vm725 = vcmask 7168
  %726 = vst.msk [vmem:[#allocation3] sm:$0xff] %vm725, %v709
  %727 = vst.msk [vmem:[#allocation3 + $0x8] sm:$0xff] %vm725, %v710
  %728 = vst.msk [vmem:[#allocation3 + $0x10] sm:$0xff] %vm725, %v711
  %729 = vst.msk [vmem:[#allocation3 + $0x18] sm:$0xff] %vm725, %v712
  %730 = vst.msk [vmem:[#allocation3 + $0x20] sm:$0xff] %vm725, %v713
  %731 = vst.msk [vmem:[#allocation3 + $0x28] sm:$0xff] %vm725, %v714
  %732 = vst.msk [vmem:[#allocation3 + $0x30] sm:$0xff] %vm725, %v715
  %733 = vst.msk [vmem:[#allocation3 + $0x38] sm:$0xff] %vm725, %v716
  %734 = vst.msk [vmem:[#allocation3 + $0x40] sm:$0xff] %vm725, %v717
  %735 = vst.msk [vmem:[#allocation3 + $0x48] sm:$0xff] %vm725, %v718
  %736 = vst.msk [vmem:[#allocation3 + $0x50] sm:$0xff] %vm725, %v719
  %737 = vst.msk [vmem:[#allocation3 + $0x58] sm:$0xff] %vm725, %v720
  %738 = vst.msk [vmem:[#allocation3 + $0x60] sm:$0xff] %vm725, %v721
  %739 = vst.msk [vmem:[#allocation3 + $0x68] sm:$0xff] %vm725, %v722
  %740 = vst.msk [vmem:[#allocation3 + $0x70] sm:$0xff] %vm725, %v723
  %741 = vst.msk [vmem:[#allocation3 + $0x78] sm:$0xff] %vm725, %v724
  %742 = vst.msk [vmem:[#allocation2] sm:$0xff] %vm725, %v453
  %743 = vst.msk [vmem:[#allocation2 + $0x8] sm:$0xff] %vm725, %v454
  %744 = vst.msk [vmem:[#allocation2 + $0x10] sm:$0xff] %vm725, %v455
  %745 = vst.msk [vmem:[#allocation2 + $0x18] sm:$0xff] %vm725, %v456
  %746 = vst.msk [vmem:[#allocation2 + $0x20] sm:$0xff] %vm725, %v457
  %747 = vst.msk [vmem:[#allocation2 + $0x28] sm:$0xff] %vm725, %v458
  %748 = vst.msk [vmem:[#allocation2 + $0x30] sm:$0xff] %vm725, %v459
  %749 = vst.msk [vmem:[#allocation2 + $0x38] sm:$0xff] %vm725, %v460
  %750 = vst.msk [vmem:[#allocation2 + $0x40] sm:$0xff] %vm725, %v461
  %751 = vst.msk [vmem:[#allocation2 + $0x48] sm:$0xff] %vm725, %v462
  %752 = vst.msk [vmem:[#allocation2 + $0x50] sm:$0xff] %vm725, %v463
  %753 = vst.msk [vmem:[#allocation2 + $0x58] sm:$0xff] %vm725, %v464
  %754 = vst.msk [vmem:[#allocation2 + $0x60] sm:$0xff] %vm725, %v465
  %755 = vst.msk [vmem:[#allocation2 + $0x68] sm:$0xff] %vm725, %v466
  %756 = vst.msk [vmem:[#allocation2 + $0x70] sm:$0xff] %vm725, %v467
  %757 = vst.msk [vmem:[#allocation2 + $0x78] sm:$0xff] %vm725, %v468
  %v758 = vld [vmem:[%s2] sm:$0xff]
  %v759 = vld [vmem:[%s2 + $0x8] sm:$0xff]
  %v760 = vld [vmem:[%s2 + $0x10] sm:$0xff]
  %v761 = vld [vmem:[%s2 + $0x18] sm:$0xff]
  %v762 = vld [vmem:[%s2 + $0x20] sm:$0xff]
  %v763 = vld [vmem:[%s2 + $0x28] sm:$0xff]
  %v764 = vld [vmem:[%s2 + $0x30] sm:$0xff]
  %v765 = vld [vmem:[%s2 + $0x38] sm:$0xff]
  %v766 = vld [vmem:[%s2 + $0x40] sm:$0xff]
  %v767 = vld [vmem:[%s2 + $0x48] sm:$0xff]
  %v768 = vld [vmem:[%s2 + $0x50] sm:$0xff]
  %v769 = vld [vmem:[%s2 + $0x58] sm:$0xff]
  %v770 = vld [vmem:[%s2 + $0x60] sm:$0xff]
  %v771 = vld [vmem:[%s2 + $0x68] sm:$0xff]
  %v772 = vld [vmem:[%s2 + $0x70] sm:$0xff]
  %v773 = vld [vmem:[%s2 + $0x78] sm:$0xff]
  %v774 = vld [vmem:[%s3] sm:$0x1]
  %775 = vset.pattern.permute.xlu0 0
  %776 = vperm.xlu0 %775, %v758
  %v777 = vpop.permute.xlu0 %776
  %778 = vset.pattern.permute.xlu0 0
  %779 = vperm.xlu0 %778, %v759
  %v780 = vpop.permute.xlu0 %779
  %781 = vset.pattern.permute.xlu0 0
  %782 = vperm.xlu0 %781, %v760
  %v783 = vpop.permute.xlu0 %782
  %784 = vset.pattern.permute.xlu0 0
  %785 = vperm.xlu0 %784, %v761
  %v786 = vpop.permute.xlu0 %785
  %787 = vset.pattern.permute.xlu0 0
  %788 = vperm.xlu0 %787, %v762
  %v789 = vpop.permute.xlu0 %788
  %790 = vset.pattern.permute.xlu0 0
  %791 = vperm.xlu0 %790, %v763
  %v792 = vpop.permute.xlu0 %791
  %793 = vset.pattern.permute.xlu0 0
  %794 = vperm.xlu0 %793, %v764
  %v795 = vpop.permute.xlu0 %794
  %796 = vset.pattern.permute.xlu0 0
  %797 = vperm.xlu0 %796, %v765
  %v798 = vpop.permute.xlu0 %797
  %799 = vset.pattern.permute.xlu0 0
  %800 = vperm.xlu0 %799, %v766
  %v801 = vpop.permute.xlu0 %800
  %802 = vset.pattern.permute.xlu0 0
  %803 = vperm.xlu0 %802, %v767
  %v804 = vpop.permute.xlu0 %803
  %805 = vset.pattern.permute.xlu0 0
  %806 = vperm.xlu0 %805, %v768
  %v807 = vpop.permute.xlu0 %806
  %808 = vset.pattern.permute.xlu0 0
  %809 = vperm.xlu0 %808, %v769
  %v810 = vpop.permute.xlu0 %809
  %811 = vset.pattern.permute.xlu0 0
  %812 = vperm.xlu0 %811, %v770
  %v813 = vpop.permute.xlu0 %812
  %814 = vset.pattern.permute.xlu0 0
  %815 = vperm.xlu0 %814, %v771
  %v816 = vpop.permute.xlu0 %815
  %817 = vset.pattern.permute.xlu0 0
  %818 = vperm.xlu0 %817, %v772
  %v819 = vpop.permute.xlu0 %818
  %820 = vset.pattern.permute.xlu0 0
  %821 = vperm.xlu0 %820, %v773
  %v822 = vpop.permute.xlu0 %821
  %v823 = vlaneseq
  %v824 = vshrl.u32 %v823, 7
  %v825 = vsub.s32 0, %v824
  %v826 = vrot.slane %v774, %v825
  %vm827 = vcmp.eq.s32.totalorder %v777, %v826
  %vm828 = vcmp.eq.s32.totalorder %v780, %v826
  %vm829 = vcmp.eq.s32.totalorder %v783, %v826
  %vm830 = vcmp.eq.s32.totalorder %v786, %v826
  %vm831 = vcmp.eq.s32.totalorder %v789, %v826
  %vm832 = vcmp.eq.s32.totalorder %v792, %v826
  %vm833 = vcmp.eq.s32.totalorder %v795, %v826
  %vm834 = vcmp.eq.s32.totalorder %v798, %v826
  %vm835 = vcmp.eq.s32.totalorder %v801, %v826
  %vm836 = vcmp.eq.s32.totalorder %v804, %v826
  %vm837 = vcmp.eq.s32.totalorder %v807, %v826
  %vm838 = vcmp.eq.s32.totalorder %v810, %v826
  %vm839 = vcmp.eq.s32.totalorder %v813, %v826
  %vm840 = vcmp.eq.s32.totalorder %v816, %v826
  %vm841 = vcmp.eq.s32.totalorder %v819, %v826
  %vm842 = vcmp.eq.s32.totalorder %v822, %v826
  %vm843 = vmxor %vm373, 1
  %vm844 = vmxor %vm374, 1
  %vm845 = vmxor %vm375, 1
  %vm846 = vmxor %vm376, 1
  %vm847 = vmxor %vm377, 1
  %vm848 = vmxor %vm378, 1
  %vm849 = vmxor %vm379, 1
  %vm850 = vmxor %vm380, 1
  %vm851 = vmxor %vm381, 1
  %vm852 = vmxor %vm382, 1
  %vm853 = vmxor %vm383, 1
  %vm854 = vmxor %vm384, 1
  %vm855 = vmxor %vm385, 1
  %vm856 = vmxor %vm386, 1
  %vm857 = vmxor %vm387, 1
  %vm858 = vmxor %vm388, 1
  %vm859 = vmand %vm827, %vm843
  %vm860 = vmand %vm828, %vm844
  %vm861 = vmand %vm829, %vm845
  %vm862 = vmand %vm830, %vm846
  %vm863 = vmand %vm831, %vm847
  %vm864 = vmand %vm832, %vm848
  %vm865 = vmand %vm833, %vm849
  %vm866 = vmand %vm834, %vm850
  %vm867 = vmand %vm835, %vm851
  %vm868 = vmand %vm836, %vm852
  %vm869 = vmand %vm837, %vm853
  %vm870 = vmand %vm838, %vm854
  %vm871 = vmand %vm839, %vm855
  %vm872 = vmand %vm840, %vm856
  %vm873 = vmand %vm841, %vm857
  %vm874 = vmand %vm842, %vm858
  %v875 = vld [vmem:[#allocation5] sm:$0xff]
  %v876 = vld [vmem:[#allocation5 + $0x8] sm:$0xff]
  %v877 = vld [vmem:[#allocation5 + $0x10] sm:$0xff]
  %v878 = vld [vmem:[#allocation5 + $0x18] sm:$0xff]
  %v879 = vld [vmem:[#allocation5 + $0x20] sm:$0xff]
  %v880 = vld [vmem:[#allocation5 + $0x28] sm:$0xff]
  %v881 = vld [vmem:[#allocation5 + $0x30] sm:$0xff]
  %v882 = vld [vmem:[#allocation5 + $0x38] sm:$0xff]
  %v883 = vld [vmem:[#allocation5 + $0x40] sm:$0xff]
  %v884 = vld [vmem:[#allocation5 + $0x48] sm:$0xff]
  %v885 = vld [vmem:[#allocation5 + $0x50] sm:$0xff]
  %v886 = vld [vmem:[#allocation5 + $0x58] sm:$0xff]
  %v887 = vld [vmem:[#allocation5 + $0x60] sm:$0xff]
  %v888 = vld [vmem:[#allocation5 + $0x68] sm:$0xff]
  %v889 = vld [vmem:[#allocation5 + $0x70] sm:$0xff]
  %v890 = vld [vmem:[#allocation5 + $0x78] sm:$0xff]
  %v891 = vsel %vm859, 1, 0
  %v892 = vsel %vm860, 1, 0
  %v893 = vsel %vm861, 1, 0
  %v894 = vsel %vm862, 1, 0
  %v895 = vsel %vm863, 1, 0
  %v896 = vsel %vm864, 1, 0
  %v897 = vsel %vm865, 1, 0
  %v898 = vsel %vm866, 1, 0
  %v899 = vsel %vm867, 1, 0
  %v900 = vsel %vm868, 1, 0
  %v901 = vsel %vm869, 1, 0
  %v902 = vsel %vm870, 1, 0
  %v903 = vsel %vm871, 1, 0
  %v904 = vsel %vm872, 1, 0
  %v905 = vsel %vm873, 1, 0
  %v906 = vsel %vm874, 1, 0
  %v907 = vcvt.s32.f32 %v891
  %v908 = vcvt.s32.f32 %v892
  %v909 = vcvt.s32.f32 %v893
  %v910 = vcvt.s32.f32 %v894
  %v911 = vcvt.s32.f32 %v895
  %v912 = vcvt.s32.f32 %v896
  %v913 = vcvt.s32.f32 %v897
  %v914 = vcvt.s32.f32 %v898
  %v915 = vcvt.s32.f32 %v899
  %v916 = vcvt.s32.f32 %v900
  %v917 = vcvt.s32.f32 %v901
  %v918 = vcvt.s32.f32 %v902
  %v919 = vcvt.s32.f32 %v903
  %v920 = vcvt.s32.f32 %v904
  %v921 = vcvt.s32.f32 %v905
  %v922 = vcvt.s32.f32 %v906
  %923 = vadd.xlane.f32.xlu0 %v907
  %v924 = vpop.xlane.xlu0 %923
  %925 = vadd.xlane.f32.xlu0 %v908
  %v926 = vpop.xlane.xlu0 %925
  %927 = vadd.xlane.f32.xlu0 %v909
  %v928 = vpop.xlane.xlu0 %927
  %929 = vadd.xlane.f32.xlu0 %v910
  %v930 = vpop.xlane.xlu0 %929
  %931 = vadd.xlane.f32.xlu0 %v911
  %v932 = vpop.xlane.xlu0 %931
  %933 = vadd.xlane.f32.xlu0 %v912
  %v934 = vpop.xlane.xlu0 %933
  %935 = vadd.xlane.f32.xlu0 %v913
  %v936 = vpop.xlane.xlu0 %935
  %937 = vadd.xlane.f32.xlu0 %v914
  %v938 = vpop.xlane.xlu0 %937
  %939 = vadd.xlane.f32.xlu0 %v915
  %v940 = vpop.xlane.xlu0 %939
  %941 = vadd.xlane.f32.xlu0 %v916
  %v942 = vpop.xlane.xlu0 %941
  %943 = vadd.xlane.f32.xlu0 %v917
  %v944 = vpop.xlane.xlu0 %943
  %945 = vadd.xlane.f32.xlu0 %v918
  %v946 = vpop.xlane.xlu0 %945
  %947 = vadd.xlane.f32.xlu0 %v919
  %v948 = vpop.xlane.xlu0 %947
  %949 = vadd.xlane.f32.xlu0 %v920
  %v950 = vpop.xlane.xlu0 %949
  %951 = vadd.xlane.f32.xlu0 %v921
  %v952 = vpop.xlane.xlu0 %951
  %953 = vadd.xlane.f32.xlu0 %v922
  %v954 = vpop.xlane.xlu0 %953
  %v955 = vadd.f32 %v875, %v924
  %v956 = vadd.f32 %v876, %v926
  %v957 = vadd.f32 %v877, %v928
  %v958 = vadd.f32 %v878, %v930
  %v959 = vadd.f32 %v879, %v932
  %v960 = vadd.f32 %v880, %v934
  %v961 = vadd.f32 %v881, %v936
  %v962 = vadd.f32 %v882, %v938
  %v963 = vadd.f32 %v883, %v940
  %v964 = vadd.f32 %v884, %v942
  %v965 = vadd.f32 %v885, %v944
  %v966 = vadd.f32 %v886, %v946
  %v967 = vadd.f32 %v887, %v948
  %v968 = vadd.f32 %v888, %v950
  %v969 = vadd.f32 %v889, %v952
  %v970 = vadd.f32 %v890, %v954
  %971 = vst.msk [vmem:[#allocation5] sm:$0xff] %vm725, %v955
  %972 = vst.msk [vmem:[#allocation5 + $0x8] sm:$0xff] %vm725, %v956
  %973 = vst.msk [vmem:[#allocation5 + $0x10] sm:$0xff] %vm725, %v957
  %974 = vst.msk [vmem:[#allocation5 + $0x18] sm:$0xff] %vm725, %v958
  %975 = vst.msk [vmem:[#allocation5 + $0x20] sm:$0xff] %vm725, %v959
  %976 = vst.msk [vmem:[#allocation5 + $0x28] sm:$0xff] %vm725, %v960
  %977 = vst.msk [vmem:[#allocation5 + $0x30] sm:$0xff] %vm725, %v961
  %978 = vst.msk [vmem:[#allocation5 + $0x38] sm:$0xff] %vm725, %v962
  %979 = vst.msk [vmem:[#allocation5 + $0x40] sm:$0xff] %vm725, %v963
  %980 = vst.msk [vmem:[#allocation5 + $0x48] sm:$0xff] %vm725, %v964
  %981 = vst.msk [vmem:[#allocation5 + $0x50] sm:$0xff] %vm725, %v965
  %982 = vst.msk [vmem:[#allocation5 + $0x58] sm:$0xff] %vm725, %v966
  %983 = vst.msk [vmem:[#allocation5 + $0x60] sm:$0xff] %vm725, %v967
  %984 = vst.msk [vmem:[#allocation5 + $0x68] sm:$0xff] %vm725, %v968
  %985 = vst.msk [vmem:[#allocation5 + $0x70] sm:$0xff] %vm725, %v969
  %986 = vst.msk [vmem:[#allocation5 + $0x78] sm:$0xff] %vm725, %v970
  %v987 = vld [vmem:[#allocation4] sm:$0xff]
  %v988 = vld [vmem:[#allocation4 + $0x8] sm:$0xff]
  %v989 = vld [vmem:[#allocation4 + $0x10] sm:$0xff]
  %v990 = vld [vmem:[#allocation4 + $0x18] sm:$0xff]
  %v991 = vld [vmem:[#allocation4 + $0x20] sm:$0xff]
  %v992 = vld [vmem:[#allocation4 + $0x28] sm:$0xff]
  %v993 = vld [vmem:[#allocation4 + $0x30] sm:$0xff]
  %v994 = vld [vmem:[#allocation4 + $0x38] sm:$0xff]
  %v995 = vld [vmem:[#allocation4 + $0x40] sm:$0xff]
  %v996 = vld [vmem:[#allocation4 + $0x48] sm:$0xff]
  %v997 = vld [vmem:[#allocation4 + $0x50] sm:$0xff]
  %v998 = vld [vmem:[#allocation4 + $0x58] sm:$0xff]
  %v999 = vld [vmem:[#allocation4 + $0x60] sm:$0xff]
  %v1000 = vld [vmem:[#allocation4 + $0x68] sm:$0xff]
  %v1001 = vld [vmem:[#allocation4 + $0x70] sm:$0xff]
  %v1002 = vld [vmem:[#allocation4 + $0x78] sm:$0xff]
  %v1003 = vsel %vm859, %v252, 0.0
  %v1004 = vsel %vm860, %v255, 0.0
  %v1005 = vsel %vm861, %v260, 0.0
  %v1006 = vsel %vm862, %v263, 0.0
  %v1007 = vsel %vm863, %v268, 0.0
  %v1008 = vsel %vm864, %v271, 0.0
  %v1009 = vsel %vm865, %v276, 0.0
  %v1010 = vsel %vm866, %v279, 0.0
  %v1011 = vsel %vm867, %v284, 0.0
  %v1012 = vsel %vm868, %v287, 0.0
  %v1013 = vsel %vm869, %v292, 0.0
  %v1014 = vsel %vm870, %v295, 0.0
  %v1015 = vsel %vm871, %v300, 0.0
  %v1016 = vsel %vm872, %v303, 0.0
  %v1017 = vsel %vm873, %v308, 0.0
  %v1018 = vsel %vm874, %v311, 0.0
  %1019 = vadd.xlane.f32.xlu0 %v1003
  %v1020 = vpop.xlane.xlu0 %1019
  %1021 = vadd.xlane.f32.xlu0 %v1004
  %v1022 = vpop.xlane.xlu0 %1021
  %1023 = vadd.xlane.f32.xlu0 %v1005
  %v1024 = vpop.xlane.xlu0 %1023
  %1025 = vadd.xlane.f32.xlu0 %v1006
  %v1026 = vpop.xlane.xlu0 %1025
  %1027 = vadd.xlane.f32.xlu0 %v1007
  %v1028 = vpop.xlane.xlu0 %1027
  %1029 = vadd.xlane.f32.xlu0 %v1008
  %v1030 = vpop.xlane.xlu0 %1029
  %1031 = vadd.xlane.f32.xlu0 %v1009
  %v1032 = vpop.xlane.xlu0 %1031
  %1033 = vadd.xlane.f32.xlu0 %v1010
  %v1034 = vpop.xlane.xlu0 %1033
  %1035 = vadd.xlane.f32.xlu0 %v1011
  %v1036 = vpop.xlane.xlu0 %1035
  %1037 = vadd.xlane.f32.xlu0 %v1012
  %v1038 = vpop.xlane.xlu0 %1037
  %1039 = vadd.xlane.f32.xlu0 %v1013
  %v1040 = vpop.xlane.xlu0 %1039
  %1041 = vadd.xlane.f32.xlu0 %v1014
  %v1042 = vpop.xlane.xlu0 %1041
  %1043 = vadd.xlane.f32.xlu0 %v1015
  %v1044 = vpop.xlane.xlu0 %1043
  %1045 = vadd.xlane.f32.xlu0 %v1016
  %v1046 = vpop.xlane.xlu0 %1045
  %1047 = vadd.xlane.f32.xlu0 %v1017
  %v1048 = vpop.xlane.xlu0 %1047
  %1049 = vadd.xlane.f32.xlu0 %v1018
  %v1050 = vpop.xlane.xlu0 %1049
  %v1051 = vadd.f32 %v987, %v1020
  %v1052 = vadd.f32 %v988, %v1022
  %v1053 = vadd.f32 %v989, %v1024
  %v1054 = vadd.f32 %v990, %v1026
  %v1055 = vadd.f32 %v991, %v1028
  %v1056 = vadd.f32 %v992, %v1030
  %v1057 = vadd.f32 %v993, %v1032
  %v1058 = vadd.f32 %v994, %v1034
  %v1059 = vadd.f32 %v995, %v1036
  %v1060 = vadd.f32 %v996, %v1038
  %v1061 = vadd.f32 %v997, %v1040
  %v1062 = vadd.f32 %v998, %v1042
  %v1063 = vadd.f32 %v999, %v1044
  %v1064 = vadd.f32 %v1000, %v1046
  %v1065 = vadd.f32 %v1001, %v1048
  %v1066 = vadd.f32 %v1002, %v1050
  %1067 = vst.msk [vmem:[#allocation4] sm:$0xff] %vm725, %v1051
  %1068 = vst.msk [vmem:[#allocation4 + $0x8] sm:$0xff] %vm725, %v1052
  %1069 = vst.msk [vmem:[#allocation4 + $0x10] sm:$0xff] %vm725, %v1053
  %1070 = vst.msk [vmem:[#allocation4 + $0x18] sm:$0xff] %vm725, %v1054
  %1071 = vst.msk [vmem:[#allocation4 + $0x20] sm:$0xff] %vm725, %v1055
  %1072 = vst.msk [vmem:[#allocation4 + $0x28] sm:$0xff] %vm725, %v1056
  %1073 = vst.msk [vmem:[#allocation4 + $0x30] sm:$0xff] %vm725, %v1057
  %1074 = vst.msk [vmem:[#allocation4 + $0x38] sm:$0xff] %vm725, %v1058
  %1075 = vst.msk [vmem:[#allocation4 + $0x40] sm:$0xff] %vm725, %v1059
  %1076 = vst.msk [vmem:[#allocation4 + $0x48] sm:$0xff] %vm725, %v1060
  %1077 = vst.msk [vmem:[#allocation4 + $0x50] sm:$0xff] %vm725, %v1061
  %1078 = vst.msk [vmem:[#allocation4 + $0x58] sm:$0xff] %vm725, %v1062
  %1079 = vst.msk [vmem:[#allocation4 + $0x60] sm:$0xff] %vm725, %v1063
  %1080 = vst.msk [vmem:[#allocation4 + $0x68] sm:$0xff] %vm725, %v1064
  %1081 = vst.msk [vmem:[#allocation4 + $0x70] sm:$0xff] %vm725, %v1065
  %1082 = vst.msk [vmem:[#allocation4 + $0x78] sm:$0xff] %vm725, %v1066
  // Predicated region
  $region22: #{tpu_custom_call.1} parent=0 // pred_check
    %p1083 = pneg %p20
  $region23: #{tpu_custom_call.1} parent=0 // pred_check_branch
    %1085 = sbr.rel (%p1083) target = $region25
  $region24: #{tpu_custom_call.1} parent=0 // pred_region
    %vm1086 = vcmp.lt.s32.totalorder %v333, 8
    %vm1087 = vcmp.lt.s32.totalorder %v334, 8
    %vm1088 = vcmp.lt.s32.totalorder %v335, 8
    %vm1089 = vcmp.lt.s32.totalorder %v336, 8
    %vm1090 = vcmp.lt.s32.totalorder %v337, 8
    %vm1091 = vcmp.lt.s32.totalorder %v338, 8
    %vm1092 = vcmp.lt.s32.totalorder %v339, 8
    %vm1093 = vcmp.lt.s32.totalorder %v340, 8
    %vm1094 = vcmp.lt.s32.totalorder %v341, 8
    %vm1095 = vcmp.lt.s32.totalorder %v342, 8
    %vm1096 = vcmp.lt.s32.totalorder %v343, 8
    %vm1097 = vcmp.lt.s32.totalorder %v344, 8
    %vm1098 = vcmp.lt.s32.totalorder %v345, 8
    %vm1099 = vcmp.lt.s32.totalorder %v346, 8
    %vm1100 = vcmp.lt.s32.totalorder %v347, 8
    %vm1101 = vcmp.lt.s32.totalorder %v348, 8
    %v1102 = vld [vmem:[#allocation5] sm:$0xff]
    %v1103 = vld [vmem:[#allocation5 + $0x8] sm:$0xff]
    %v1104 = vld [vmem:[#allocation5 + $0x10] sm:$0xff]
    %v1105 = vld [vmem:[#allocation5 + $0x18] sm:$0xff]
    %v1106 = vld [vmem:[#allocation5 + $0x20] sm:$0xff]
    %v1107 = vld [vmem:[#allocation5 + $0x28] sm:$0xff]
    %v1108 = vld [vmem:[#allocation5 + $0x30] sm:$0xff]
    %v1109 = vld [vmem:[#allocation5 + $0x38] sm:$0xff]
    %v1110 = vld [vmem:[#allocation5 + $0x40] sm:$0xff]
    %v1111 = vld [vmem:[#allocation5 + $0x48] sm:$0xff]
    %v1112 = vld [vmem:[#allocation5 + $0x50] sm:$0xff]
    %v1113 = vld [vmem:[#allocation5 + $0x58] sm:$0xff]
    %v1114 = vld [vmem:[#allocation5 + $0x60] sm:$0xff]
    %v1115 = vld [vmem:[#allocation5 + $0x68] sm:$0xff]
    %v1116 = vld [vmem:[#allocation5 + $0x70] sm:$0xff]
    %v1117 = vld [vmem:[#allocation5 + $0x78] sm:$0xff]
    %vm1118 = vcmp.gt.f32.partialorder %v1102, 0.0
    %vm1119 = vcmp.gt.f32.partialorder %v1103, 0.0
    %vm1120 = vcmp.gt.f32.partialorder %v1104, 0.0
    %vm1121 = vcmp.gt.f32.partialorder %v1105, 0.0
    %vm1122 = vcmp.gt.f32.partialorder %v1106, 0.0
    %vm1123 = vcmp.gt.f32.partialorder %v1107, 0.0
    %vm1124 = vcmp.gt.f32.partialorder %v1108, 0.0
    %vm1125 = vcmp.gt.f32.partialorder %v1109, 0.0
    %vm1126 = vcmp.gt.f32.partialorder %v1110, 0.0
    %vm1127 = vcmp.gt.f32.partialorder %v1111, 0.0
    %vm1128 = vcmp.gt.f32.partialorder %v1112, 0.0
    %vm1129 = vcmp.gt.f32.partialorder %v1113, 0.0
    %vm1130 = vcmp.gt.f32.partialorder %v1114, 0.0
    %vm1131 = vcmp.gt.f32.partialorder %v1115, 0.0
    %vm1132 = vcmp.gt.f32.partialorder %v1116, 0.0
    %vm1133 = vcmp.gt.f32.partialorder %v1117, 0.0
    %vm1134 = vmand %vm1118, %vm1086
    %vm1135 = vmand %vm1119, %vm1087
    %vm1136 = vmand %vm1120, %vm1088
    %vm1137 = vmand %vm1121, %vm1089
    %vm1138 = vmand %vm1122, %vm1090
    %vm1139 = vmand %vm1123, %vm1091
    %vm1140 = vmand %vm1124, %vm1092
    %vm1141 = vmand %vm1125, %vm1093
    %vm1142 = vmand %vm1126, %vm1094
    %vm1143 = vmand %vm1127, %vm1095
    %vm1144 = vmand %vm1128, %vm1096
    %vm1145 = vmand %vm1129, %vm1097
    %vm1146 = vmand %vm1130, %vm1098
    %vm1147 = vmand %vm1131, %vm1099
    %vm1148 = vmand %vm1132, %vm1100
    %vm1149 = vmand %vm1133, %vm1101
    %v1150 = vld [vmem:[#allocation2] sm:$0xff]
    %v1151 = vld [vmem:[#allocation2 + $0x8] sm:$0xff]
    %v1152 = vld [vmem:[#allocation2 + $0x10] sm:$0xff]
    %v1153 = vld [vmem:[#allocation2 + $0x18] sm:$0xff]
    %v1154 = vld [vmem:[#allocation2 + $0x20] sm:$0xff]
    %v1155 = vld [vmem:[#allocation2 + $0x28] sm:$0xff]
    %v1156 = vld [vmem:[#allocation2 + $0x30] sm:$0xff]
    %v1157 = vld [vmem:[#allocation2 + $0x38] sm:$0xff]
    %v1158 = vld [vmem:[#allocation2 + $0x40] sm:$0xff]
    %v1159 = vld [vmem:[#allocation2 + $0x48] sm:$0xff]
    %v1160 = vld [vmem:[#allocation2 + $0x50] sm:$0xff]
    %v1161 = vld [vmem:[#allocation2 + $0x58] sm:$0xff]
    %v1162 = vld [vmem:[#allocation2 + $0x60] sm:$0xff]
    %v1163 = vld [vmem:[#allocation2 + $0x68] sm:$0xff]
    %v1164 = vld [vmem:[#allocation2 + $0x70] sm:$0xff]
    %v1165 = vld [vmem:[#allocation2 + $0x78] sm:$0xff]
    %v1166 = vld [vmem:[#allocation3] sm:$0xff]
    %v1167 = vld [vmem:[#allocation3 + $0x8] sm:$0xff]
    %v1168 = vld [vmem:[#allocation3 + $0x10] sm:$0xff]
    %v1169 = vld [vmem:[#allocation3 + $0x18] sm:$0xff]
    %v1170 = vld [vmem:[#allocation3 + $0x20] sm:$0xff]
    %v1171 = vld [vmem:[#allocation3 + $0x28] sm:$0xff]
    %v1172 = vld [vmem:[#allocation3 + $0x30] sm:$0xff]
    %v1173 = vld [vmem:[#allocation3 + $0x38] sm:$0xff]
    %v1174 = vld [vmem:[#allocation3 + $0x40] sm:$0xff]
    %v1175 = vld [vmem:[#allocation3 + $0x48] sm:$0xff]
    %v1176 = vld [vmem:[#allocation3 + $0x50] sm:$0xff]
    %v1177 = vld [vmem:[#allocation3 + $0x58] sm:$0xff]
    %v1178 = vld [vmem:[#allocation3 + $0x60] sm:$0xff]
    %v1179 = vld [vmem:[#allocation3 + $0x68] sm:$0xff]
    %v1180 = vld [vmem:[#allocation3 + $0x70] sm:$0xff]
    %v1181 = vld [vmem:[#allocation3 + $0x78] sm:$0xff]
    %v1182 = vlog2.pop %v1166
    %v1183 = vmul.f32 %v1182, 0.6931472
    %v1184 = vlog2.pop %v1167
    %v1185 = vmul.f32 %v1184, 0.6931472
    %v1186 = vlog2.pop %v1168
    %v1187 = vmul.f32 %v1186, 0.6931472
    %v1188 = vlog2.pop %v1169
    %v1189 = vmul.f32 %v1188, 0.6931472
    %v1190 = vlog2.pop %v1170
    %v1191 = vmul.f32 %v1190, 0.6931472
    %v1192 = vlog2.pop %v1171
    %v1193 = vmul.f32 %v1192, 0.6931472
    %v1194 = vlog2.pop %v1172
    %v1195 = vmul.f32 %v1194, 0.6931472
    %v1196 = vlog2.pop %v1173
    %v1197 = vmul.f32 %v1196, 0.6931472
    %v1198 = vlog2.pop %v1174
    %v1199 = vmul.f32 %v1198, 0.6931472
    %v1200 = vlog2.pop %v1175
    %v1201 = vmul.f32 %v1200, 0.6931472
    %v1202 = vlog2.pop %v1176
    %v1203 = vmul.f32 %v1202, 0.6931472
    %v1204 = vlog2.pop %v1177
    %v1205 = vmul.f32 %v1204, 0.6931472
    %v1206 = vlog2.pop %v1178
    %v1207 = vmul.f32 %v1206, 0.6931472
    %v1208 = vlog2.pop %v1179
    %v1209 = vmul.f32 %v1208, 0.6931472
    %v1210 = vlog2.pop %v1180
    %v1211 = vmul.f32 %v1210, 0.6931472
    %v1212 = vlog2.pop %v1181
    %v1213 = vmul.f32 %v1212, 0.6931472
    %v1214 = vadd.f32 %v1150, %v1183
    %v1215 = vadd.f32 %v1151, %v1185
    %v1216 = vadd.f32 %v1152, %v1187
    %v1217 = vadd.f32 %v1153, %v1189
    %v1218 = vadd.f32 %v1154, %v1191
    %v1219 = vadd.f32 %v1155, %v1193
    %v1220 = vadd.f32 %v1156, %v1195
    %v1221 = vadd.f32 %v1157, %v1197
    %v1222 = vadd.f32 %v1158, %v1199
    %v1223 = vadd.f32 %v1159, %v1201
    %v1224 = vadd.f32 %v1160, %v1203
    %v1225 = vadd.f32 %v1161, %v1205
    %v1226 = vadd.f32 %v1162, %v1207
    %v1227 = vadd.f32 %v1163, %v1209
    %v1228 = vadd.f32 %v1164, %v1211
    %v1229 = vadd.f32 %v1165, %v1213
    %v1230 = vld [vmem:[#allocation4] sm:$0xff]
    %v1231 = vld [vmem:[#allocation4 + $0x8] sm:$0xff]
    %v1232 = vld [vmem:[#allocation4 + $0x10] sm:$0xff]
    %v1233 = vld [vmem:[#allocation4 + $0x18] sm:$0xff]
    %v1234 = vld [vmem:[#allocation4 + $0x20] sm:$0xff]
    %v1235 = vld [vmem:[#allocation4 + $0x28] sm:$0xff]
    %v1236 = vld [vmem:[#allocation4 + $0x30] sm:$0xff]
    %v1237 = vld [vmem:[#allocation4 + $0x38] sm:$0xff]
    %v1238 = vld [vmem:[#allocation4 + $0x40] sm:$0xff]
    %v1239 = vld [vmem:[#allocation4 + $0x48] sm:$0xff]
    %v1240 = vld [vmem:[#allocation4 + $0x50] sm:$0xff]
    %v1241 = vld [vmem:[#allocation4 + $0x58] sm:$0xff]
    %v1242 = vld [vmem:[#allocation4 + $0x60] sm:$0xff]
    %v1243 = vld [vmem:[#allocation4 + $0x68] sm:$0xff]
    %v1244 = vld [vmem:[#allocation4 + $0x70] sm:$0xff]
    %v1245 = vld [vmem:[#allocation4 + $0x78] sm:$0xff]
    %v1246 = vmul.f32 %v1102, %v1214
    %v1247 = vmul.f32 %v1103, %v1215
    %v1248 = vmul.f32 %v1104, %v1216
    %v1249 = vmul.f32 %v1105, %v1217
    %v1250 = vmul.f32 %v1106, %v1218
    %v1251 = vmul.f32 %v1107, %v1219
    %v1252 = vmul.f32 %v1108, %v1220
    %v1253 = vmul.f32 %v1109, %v1221
    %v1254 = vmul.f32 %v1110, %v1222
    %v1255 = vmul.f32 %v1111, %v1223
    %v1256 = vmul.f32 %v1112, %v1224
    %v1257 = vmul.f32 %v1113, %v1225
    %v1258 = vmul.f32 %v1114, %v1226
    %v1259 = vmul.f32 %v1115, %v1227
    %v1260 = vmul.f32 %v1116, %v1228
    %v1261 = vmul.f32 %v1117, %v1229
    %v1262 = vsub.f32 %v1230, %v1246
    %v1263 = vsub.f32 %v1231, %v1247
    %v1264 = vsub.f32 %v1232, %v1248
    %v1265 = vsub.f32 %v1233, %v1249
    %v1266 = vsub.f32 %v1234, %v1250
    %v1267 = vsub.f32 %v1235, %v1251
    %v1268 = vsub.f32 %v1236, %v1252
    %v1269 = vsub.f32 %v1237, %v1253
    %v1270 = vsub.f32 %v1238, %v1254
    %v1271 = vsub.f32 %v1239, %v1255
    %v1272 = vsub.f32 %v1240, %v1256
    %v1273 = vsub.f32 %v1241, %v1257
    %v1274 = vsub.f32 %v1242, %v1258
    %v1275 = vsub.f32 %v1243, %v1259
    %v1276 = vsub.f32 %v1244, %v1260
    %v1277 = vsub.f32 %v1245, %v1261
    %v1278 = vsel %vm1134, %v1102, 1.0
    %v1279 = vsel %vm1135, %v1103, 1.0
    %v1280 = vsel %vm1136, %v1104, 1.0
    %v1281 = vsel %vm1137, %v1105, 1.0
    %v1282 = vsel %vm1138, %v1106, 1.0
    %v1283 = vsel %vm1139, %v1107, 1.0
    %v1284 = vsel %vm1140, %v1108, 1.0
    %v1285 = vsel %vm1141, %v1109, 1.0
    %v1286 = vsel %vm1142, %v1110, 1.0
    %v1287 = vsel %vm1143, %v1111, 1.0
    %v1288 = vsel %vm1144, %v1112, 1.0
    %v1289 = vsel %vm1145, %v1113, 1.0
    %v1290 = vsel %vm1146, %v1114, 1.0
    %v1291 = vsel %vm1147, %v1115, 1.0
    %v1292 = vsel %vm1148, %v1116, 1.0
    %v1293 = vsel %vm1149, %v1117, 1.0
    %v1294 = vrcp.pop %v1278
    %v1295 = vrcp.pop %v1279
    %v1296 = vrcp.pop %v1280
    %v1297 = vrcp.pop %v1281
    %v1298 = vrcp.pop %v1282
    %v1299 = vrcp.pop %v1283
    %v1300 = vrcp.pop %v1284
    %v1301 = vrcp.pop %v1285
    %v1302 = vrcp.pop %v1286
    %v1303 = vrcp.pop %v1287
    %v1304 = vrcp.pop %v1288
    %v1305 = vrcp.pop %v1289
    %v1306 = vrcp.pop %v1290
    %v1307 = vrcp.pop %v1291
    %v1308 = vrcp.pop %v1292
    %v1309 = vrcp.pop %v1293
    %v1310 = vmul.f32 %v1262, %v1294
    %v1311 = vmul.f32 %v1263, %v1295
    %v1312 = vmul.f32 %v1264, %v1296
    %v1313 = vmul.f32 %v1265, %v1297
    %v1314 = vmul.f32 %v1266, %v1298
    %v1315 = vmul.f32 %v1267, %v1299
    %v1316 = vmul.f32 %v1268, %v1300
    %v1317 = vmul.f32 %v1269, %v1301
    %v1318 = vmul.f32 %v1270, %v1302
    %v1319 = vmul.f32 %v1271, %v1303
    %v1320 = vmul.f32 %v1272, %v1304
    %v1321 = vmul.f32 %v1273, %v1305
    %v1322 = vmul.f32 %v1274, %v1306
    %v1323 = vmul.f32 %v1275, %v1307
    %v1324 = vmul.f32 %v1276, %v1308
    %v1325 = vmul.f32 %v1277, %v1309
    %v1326 = vsel %vm1134, %v1310, 0.0
    %v1327 = vsel %vm1135, %v1311, 0.0
    %v1328 = vsel %vm1136, %v1312, 0.0
    %v1329 = vsel %vm1137, %v1313, 0.0
    %v1330 = vsel %vm1138, %v1314, 0.0
    %v1331 = vsel %vm1139, %v1315, 0.0
    %v1332 = vsel %vm1140, %v1316, 0.0
    %v1333 = vsel %vm1141, %v1317, 0.0
    %v1334 = vsel %vm1142, %v1318, 0.0
    %v1335 = vsel %vm1143, %v1319, 0.0
    %v1336 = vsel %vm1144, %v1320, 0.0
    %v1337 = vsel %vm1145, %v1321, 0.0
    %v1338 = vsel %vm1146, %v1322, 0.0
    %v1339 = vsel %vm1147, %v1323, 0.0
    %v1340 = vsel %vm1148, %v1324, 0.0
    %v1341 = vsel %vm1149, %v1325, 0.0
    %1342 = vst.msk [vmem:[%s4] sm:$0xff] %vm725, %v1326
    %1343 = vst.msk [vmem:[%s4 + $0x8] sm:$0xff] %vm725, %v1327
    %1344 = vst.msk [vmem:[%s4 + $0x10] sm:$0xff] %vm725, %v1328
    %1345 = vst.msk [vmem:[%s4 + $0x18] sm:$0xff] %vm725, %v1329
    %1346 = vst.msk [vmem:[%s4 + $0x20] sm:$0xff] %vm725, %v1330
    %1347 = vst.msk [vmem:[%s4 + $0x28] sm:$0xff] %vm725, %v1331
    %1348 = vst.msk [vmem:[%s4 + $0x30] sm:$0xff] %vm725, %v1332
    %1349 = vst.msk [vmem:[%s4 + $0x38] sm:$0xff] %vm725, %v1333
    %1350 = vst.msk [vmem:[%s4 + $0x40] sm:$0xff] %vm725, %v1334
    %1351 = vst.msk [vmem:[%s4 + $0x48] sm:$0xff] %vm725, %v1335
    %1352 = vst.msk [vmem:[%s4 + $0x50] sm:$0xff] %vm725, %v1336
    %1353 = vst.msk [vmem:[%s4 + $0x58] sm:$0xff] %vm725, %v1337
    %1354 = vst.msk [vmem:[%s4 + $0x60] sm:$0xff] %vm725, %v1338
    %1355 = vst.msk [vmem:[%s4 + $0x68] sm:$0xff] %vm725, %v1339
    %1356 = vst.msk [vmem:[%s4 + $0x70] sm:$0xff] %vm725, %v1340
    %1357 = vst.msk [vmem:[%s4 + $0x78] sm:$0xff] %vm725, %v1341
    %v1358 = vsel %vm1134, 1, 0
    %v1359 = vsel %vm1135, 1, 0
    %v1360 = vsel %vm1136, 1, 0
    %v1361 = vsel %vm1137, 1, 0
    %v1362 = vsel %vm1138, 1, 0
    %v1363 = vsel %vm1139, 1, 0
    %v1364 = vsel %vm1140, 1, 0
    %v1365 = vsel %vm1141, 1, 0
    %v1366 = vsel %vm1142, 1, 0
    %v1367 = vsel %vm1143, 1, 0
    %v1368 = vsel %vm1144, 1, 0
    %v1369 = vsel %vm1145, 1, 0
    %v1370 = vsel %vm1146, 1, 0
    %v1371 = vsel %vm1147, 1, 0
    %v1372 = vsel %vm1148, 1, 0
    %v1373 = vsel %vm1149, 1, 0
    %v1374 = vcvt.s32.f32 %v1358
    %v1375 = vcvt.s32.f32 %v1359
    %v1376 = vcvt.s32.f32 %v1360
    %v1377 = vcvt.s32.f32 %v1361
    %v1378 = vcvt.s32.f32 %v1362
    %v1379 = vcvt.s32.f32 %v1363
    %v1380 = vcvt.s32.f32 %v1364
    %v1381 = vcvt.s32.f32 %v1365
    %v1382 = vcvt.s32.f32 %v1366
    %v1383 = vcvt.s32.f32 %v1367
    %v1384 = vcvt.s32.f32 %v1368
    %v1385 = vcvt.s32.f32 %v1369
    %v1386 = vcvt.s32.f32 %v1370
    %v1387 = vcvt.s32.f32 %v1371
    %v1388 = vcvt.s32.f32 %v1372
    %v1389 = vcvt.s32.f32 %v1373
    %1390 = vst.msk [vmem:[%s5] sm:$0xff] %vm725, %v1374
    %1391 = vst.msk [vmem:[%s5 + $0x8] sm:$0xff] %vm725, %v1375
    %1392 = vst.msk [vmem:[%s5 + $0x10] sm:$0xff] %vm725, %v1376
    %1393 = vst.msk [vmem:[%s5 + $0x18] sm:$0xff] %vm725, %v1377
    %1394 = vst.msk [vmem:[%s5 + $0x20] sm:$0xff] %vm725, %v1378
    %1395 = vst.msk [vmem:[%s5 + $0x28] sm:$0xff] %vm725, %v1379
    %1396 = vst.msk [vmem:[%s5 + $0x30] sm:$0xff] %vm725, %v1380
    %1397 = vst.msk [vmem:[%s5 + $0x38] sm:$0xff] %vm725, %v1381
    %1398 = vst.msk [vmem:[%s5 + $0x40] sm:$0xff] %vm725, %v1382
    %1399 = vst.msk [vmem:[%s5 + $0x48] sm:$0xff] %vm725, %v1383
    %1400 = vst.msk [vmem:[%s5 + $0x50] sm:$0xff] %vm725, %v1384
    %1401 = vst.msk [vmem:[%s5 + $0x58] sm:$0xff] %vm725, %v1385
    %1402 = vst.msk [vmem:[%s5 + $0x60] sm:$0xff] %vm725, %v1386
    %1403 = vst.msk [vmem:[%s5 + $0x68] sm:$0xff] %vm725, %v1387
    %1404 = vst.msk [vmem:[%s5 + $0x70] sm:$0xff] %vm725, %v1388
    %1405 = vst.msk [vmem:[%s5 + $0x78] sm:$0xff] %vm725, %v1389
  $region25: #{tpu_custom_call.1} parent=0 // pred_fallthru
    _
  // Predicated region
  $region26: #{tpu_custom_call.1} parent=0 // pred_check
    _
  $region27: #{tpu_custom_call.1} parent=0 // pred_check_branch
    %1407 = sbr.rel (0) target = $region29
  $region28: #{tpu_custom_call.1} parent=0 // pred_region
    _
  $region29: #{tpu_custom_call.1} parent=0 // pred_fallthru
    _
  // Predicated region
  $region30: #{tpu_custom_call.1} parent=0 // pred_check
    _
  $region31: #{tpu_custom_call.1} parent=0 // pred_check_branch
    %1409 = sbr.rel (0) target = $region33
  $region32: #{tpu_custom_call.1} parent=0 // pred_region
    _
  $region33: #{tpu_custom_call.1} parent=0 // pred_fallthru
    _
  // Predicated region
  $region34: #{tpu_custom_call.1} parent=0 // pred_check
    _
  $region35: #{tpu_custom_call.1} parent=0 // pred_check_branch
    %1411 = sbr.rel (0) target = $region37
  $region36: #{tpu_custom_call.1} parent=0 // pred_region
    _
  $region37: #{tpu_custom_call.1} parent=0 // pred_fallthru
    _
  // Predicated region
  $region38: #{tpu_custom_call.1} parent=0 // pred_check
    _
  $region39: #{tpu_custom_call.1} parent=0 // pred_check_branch
    %1413 = sbr.rel (0) target = $region41
  $region40: #{tpu_custom_call.1} parent=0 // pred_region
    _
  $region41: #{tpu_custom_call.1} parent=0 // pred_fallthru
    _

</llo_original>
